<compile_context>
chip_gen: v7x
topology: tpu7x:2x2x1
jax: 0.10.0
libtpu: 0.0.40
codegen_flags: <defaults>
</compile_context>

<pallas_src>
import math
import jax
import jax.numpy as jnp
from jax import lax
from jax.experimental import pallas as pl
from jax.experimental.pallas import tpu as pltpu


# ----------------------------------------------------------------------------
# helpers
# ----------------------------------------------------------------------------
def _rmsnorm(x, w, eps):
    # x: (S, D) f32, w: (1, D) f32  -> matches torch RMSNorm in fp32
    ms = jnp.mean(x * x, axis=-1, keepdims=True)
    return x * lax.rsqrt(ms + eps) * w


def precompute_freqs(head_dim, end, theta=10000.0):
    inv = 1.0 / (theta ** (jnp.arange(0, head_dim, 2, dtype=jnp.float32) / head_dim))
    t = jnp.arange(end, dtype=jnp.float32)
    f = jnp.outer(t, inv)                      # (end, head_dim // 2)
    return jnp.cos(f), jnp.sin(f)


# ----------------------------------------------------------------------------
# fused full-model Pallas kernel
# ----------------------------------------------------------------------------
def make_forward_kernel(S, D, HD, NH, NKV, HID, V, eps):
    NREP = NH // NKV
    HD2 = HD // 2
    scale = 1.0 / math.sqrt(HD)
    bf16 = jnp.bfloat16

    def kernel(x_ref, cos_ref, sin_ref,
               anw_ref, wq_ref, wk_ref, wv_ref, wo_ref,
               fnw_ref, w1_ref, w2_ref, w3_ref,
               nfw_ref, wcls_ref,
               logits_ref, h_vmem):
        l = pl.program_id(1)

        # layer 0: load this batch element's embeddings into the VMEM carry.
        @pl.when(l == 0)
        def _():
            h_vmem[...] = x_ref[0]

        x = h_vmem[...]                                    # (S, D) f32

        # ---------------- attention branch ----------------
        xn = _rmsnorm(x, anw_ref[0], eps)
        xn_b = xn.astype(bf16)
        xq_in = jnp.broadcast_to(xn_b[None], (NH, S, D))
        xkv_in = jnp.broadcast_to(xn_b[None], (NKV, S, D))

        # batched head projections: (H, S, D) x (H, D, HD) -> (H, S, HD), f32 acc
        q = jnp.einsum('hsd,hdk->hsk', xq_in, wq_ref[0],
                       preferred_element_type=jnp.float32)
        k = jnp.einsum('hsd,hdk->hsk', xkv_in, wk_ref[0],
                       preferred_element_type=jnp.float32)
        v = jnp.einsum('hsd,hdk->hsk', xkv_in, wv_ref[0],
                       preferred_element_type=jnp.float32)

        # RoPE in split-half layout (wrapper permuted wq/wk columns): pure
        # element-wise VPU math, no rot matmul.
        cos = cos_ref[...][None]                           # (1, S, HD2)
        sin = sin_ref[...][None]

        def rope(t):
            tr, ti = t[..., :HD2], t[..., HD2:]
            return jnp.concatenate(
                [tr * cos - ti * sin, tr * sin + ti * cos], axis=-1)

        q = rope(q) * scale                                # fold 1/sqrt(HD) once
        k = rope(k)

        # GQA: repeat_interleave kv heads up to NH (broadcast + merge lead dims)
        k = jnp.broadcast_to(k[:, None], (NKV, NREP, S, HD)).reshape(NH, S, HD)
        v = jnp.broadcast_to(v[:, None], (NKV, NREP, S, HD)).reshape(NH, S, HD)

        # batched attention over the head axis
        s = jnp.einsum('hqd,hkd->hqk', q.astype(bf16), k.astype(bf16),
                       preferred_element_type=jnp.float32)     # (H, S, S)
        row = lax.broadcasted_iota(jnp.int32, (S, S), 0)
        col = lax.broadcasted_iota(jnp.int32, (S, S), 1)
        s = jnp.where((col <= row)[None], s, -jnp.inf)

        m = jnp.max(s, axis=-1, keepdims=True)
        p = jnp.exp(s - m)
        p = p * pl.reciprocal(jnp.sum(p, axis=-1, keepdims=True), approx=True)

        ctx = jnp.einsum('hqk,hkd->hqd', p.astype(bf16), v.astype(bf16),
                         preferred_element_type=jnp.float32)   # (H, S, HD)

        # single Wo projection after concatenating head outputs
        attn_cat = jnp.concatenate([ctx[h] for h in range(NH)], axis=-1)  # (S, D)
        attn = jnp.dot(attn_cat.astype(bf16), wo_ref[0],
                       preferred_element_type=jnp.float32)

        h1 = x + attn

        # ---------------- SwiGLU feed-forward branch ----------------
        hn = _rmsnorm(h1, fnw_ref[0], eps)
        hn_b = hn.astype(bf16)
        g = jnp.dot(hn_b, w1_ref[0], preferred_element_type=jnp.float32)
        u = jnp.dot(hn_b, w3_ref[0], preferred_element_type=jnp.float32)
        act = (jax.nn.silu(g) * u).astype(bf16)
        ff = jnp.dot(act, w2_ref[0], preferred_element_type=jnp.float32)

        h2 = h1 + ff
        h_vmem[...] = h2

        # last layer: fused final RMSNorm + tied-embedding logits (last token)
        @pl.when(l == pl.num_programs(1) - 1)
        def _():
            last = _rmsnorm(h2[S - 1:S, :], nfw_ref[...], eps)       # (1, D)
            logits_ref[0] = jnp.dot(last.astype(bf16), wcls_ref[...],
                                    preferred_element_type=jnp.float32)

    return kernel


def transformer_forward_pallas(x_emb, p, *, NH, NKV, eps):
    B, S, D = x_emb.shape
    L = p["wq"].shape[0]
    HD = D // NH
    HD2 = HD // 2
    HID = p["w1"].shape[2]
    V = p["wcls"].shape[1]

    kernel = make_forward_kernel(S, D, HD, NH, NKV, HID, V, eps)

    # TODO(synk): at real model dims (D>=2048, HID>=5632, V=32k) add grid axes
    # over HID / V (w1/w3 column tiles, w2 row tiles, vocab tiles) to stay inside
    # v7x's 64 MiB VMEM; full per-layer weight blocks are fine at these toy sizes.
    return pl.pallas_call(
        kernel,
        out_shape=jax.ShapeDtypeStruct((B, 1, V), jnp.float32),
        grid_spec=pltpu.PrefetchScalarGridSpec(
            num_scalar_prefetch=0,
            grid=(B, L),
            in_specs=[
                pl.BlockSpec((1, S, D), lambda b, l: (b, 0, 0)),          # x (emb)
                pl.BlockSpec((S, HD2), lambda b, l: (0, 0)),              # cos
                pl.BlockSpec((S, HD2), lambda b, l: (0, 0)),              # sin
                pl.BlockSpec((1, 1, D), lambda b, l: (l, 0, 0)),          # attn norm w
                pl.BlockSpec((1, NH, D, HD), lambda b, l: (l, 0, 0, 0)),  # wq heads
                pl.BlockSpec((1, NKV, D, HD), lambda b, l: (l, 0, 0, 0)),  # wk heads
                pl.BlockSpec((1, NKV, D, HD), lambda b, l: (l, 0, 0, 0)),  # wv heads
                pl.BlockSpec((1, D, D), lambda b, l: (l, 0, 0)),          # woT
                pl.BlockSpec((1, 1, D), lambda b, l: (l, 0, 0)),          # ffn norm w
                pl.BlockSpec((1, D, HID), lambda b, l: (l, 0, 0)),        # w1T
                pl.BlockSpec((1, HID, D), lambda b, l: (l, 0, 0)),        # w2T
                pl.BlockSpec((1, D, HID), lambda b, l: (l, 0, 0)),        # w3T
                pl.BlockSpec((1, D), lambda b, l: (0, 0)),                # final norm
                pl.BlockSpec((D, V), lambda b, l: (0, 0)),                # tied lm head
            ],
            out_specs=pl.BlockSpec((1, 1, V), lambda b, l: (b, 0, 0)),
            scratch_shapes=[pltpu.VMEM((S, D), jnp.float32)],             # layer carry
        ),
        compiler_params=pltpu.CompilerParams(
            dimension_semantics=("parallel", "arbitrary")),
    )(x_emb, p["cos"], p["sin"], p["anw"], p["wq"], p["wk"], p["wv"], p["wo"],
      p["fnw"], p["w1"], p["w2"], p["w3"], p["nfw"], p["wcls"])


# ----------------------------------------------------------------------------
# wrapper-side (one-time) weight preprocessing
# ----------------------------------------------------------------------------
def prepare_params(layers, emb, norm_w, cos_pair, sin_pair, *, NH, NKV):
    D = emb.shape[1]
    HD = D // NH
    HD2 = HD // 2
    bf = jnp.bfloat16

    def split_half_heads(wT, nheads):
        # (D, nheads*HD) -> (nheads, D, HD); per-head columns reordered from the
        # interleaved RoPE layout (r0,i0,r1,i1,...) to split-half (r..., i...).
        return (wT.reshape(D, nheads, HD2, 2)
                  .transpose(1, 0, 3, 2)
                  .reshape(nheads, D, HD))

    def plain_heads(wT, nheads):
        return wT.reshape(D, nheads, HD).transpose(1, 0, 2)

    return dict(
        anw=jnp.stack([l["anw"] for l in layers]),                            # (L,1,D) f32
        fnw=jnp.stack([l["fnw"] for l in layers]),                            # (L,1,D) f32
        wq=jnp.stack([split_half_heads(l["wqT"], NH) for l in layers]).astype(bf),
        wk=jnp.stack([split_half_heads(l["wkT"], NKV) for l in layers]).astype(bf),
        wv=jnp.stack([plain_heads(l["wvT"], NKV) for l in layers]).astype(bf),
        wo=jnp.stack([l["woT"] for l in layers]).astype(bf),
        w1=jnp.stack([l["w1T"] for l in layers]).astype(bf),
        w2=jnp.stack([l["w2T"] for l in layers]).astype(bf),
        w3=jnp.stack([l["w3T"] for l in layers]).astype(bf),
        nfw=norm_w,                                                           # (1,D) f32
        wcls=emb.T.astype(bf),                                                # (D,V) bf16
        cos=cos_pair, sin=sin_pair,                                           # (S,HD//2) f32
    )


# ----------------------------------------------------------------------------
# Pure-JAX f32 reference (mirrors the PyTorch forward exactly) for validation
# ----------------------------------------------------------------------------
def ref_forward(tokens, emb, layers, norm_w, cos_pair, sin_pair, *, NH, NKV, eps):
    B, S = tokens.shape
    D = emb.shape[1]
    HD = D // NH
    NREP = NH // NKV

    def rms(x, w):
        return x * lax.rsqrt(jnp.mean(x * x, -1, keepdims=True) + eps) * w

    def rope(x):  # x: (B, S, H, HD), interleaved pairs
        xr, xi = x[..., 0::2], x[..., 1::2]
        c = cos_pair[None, :, None, :]
        s = sin_pair[None, :, None, :]
        out_r = xr * c - xi * s
        out_i = xr * s + xi * c
        return jnp.stack([out_r, out_i], axis=-1).reshape(x.shape)

    h = emb[tokens]
    for lp in layers:
        xn = rms(h, lp["anw"])
        q = (xn @ lp["wqT"]).reshape(B, S, NH, HD)
        k = (xn @ lp["wkT"]).reshape(B, S, NKV, HD)
        v = (xn @ lp["wvT"]).reshape(B, S, NKV, HD)
        q, k = rope(q), rope(k)
        k = jnp.repeat(k, NREP, axis=2)
        v = jnp.repeat(v, NREP, axis=2)
        qt, kt, vt = (a.transpose(0, 2, 1, 3) for a in (q, k, v))
        s = jnp.einsum("bhqd,bhkd->bhqk", qt, kt) / math.sqrt(HD)
        mask = jnp.tril(jnp.ones((S, S), bool))
        s = jnp.where(mask[None, None], s, -jnp.inf)
        p = jax.nn.softmax(s, axis=-1)
        out = jnp.einsum("bhqk,bhkd->bhqd", p, vt)
        out = out.transpose(0, 2, 1, 3).reshape(B, S, D)
        h = h + out @ lp["woT"]
        hn = rms(h, lp["fnw"])
        h = h + (jax.nn.silu(hn @ lp["w1T"]) * (hn @ lp["w3T"])) @ lp["w2T"]
    h = rms(h, norm_w)
    return h[:, -1:, :] @ emb.T


# ----------------------------------------------------------------------------
# main
# ----------------------------------------------------------------------------
if __name__ == "__main__":
    # small ModelArgs: dim=64, n_layers=2, n_heads=4, n_kv_heads=2,
    # vocab_size=256, hidden_dim=128, max_seq_len=16, dropout=0.0 (inference)
    B, S = 2, 8
    D, NH, NKV, V, HID, L = 64, 4, 2, 256, 128, 2
    HD = D // NH
    DKV = NKV * HD
    EPS = 1e-5
    MAXSEQ = 16

    key = jax.random.PRNGKey(0)
    keys = jax.random.split(key, 2 + 7 * L)
    std = 0.02
    std_small = 0.02 / math.sqrt(2 * L)   # for w3.weight / wo.weight

    emb = std * jax.random.normal(keys[0], (V, D), jnp.float32)  # tied with output
    tokens = jax.random.randint(keys[1], (B, S), 0, V)
    norm_w = jnp.ones((1, D), jnp.float32)

    layers = []
    ki = 2
    for _ in range(L):
        layers.append(dict(
            anw=jnp.ones((1, D), jnp.float32),
            fnw=jnp.ones((1, D), jnp.float32),
            wqT=std * jax.random.normal(keys[ki + 0], (D, D), jnp.float32),
            wkT=std * jax.random.normal(keys[ki + 1], (D, DKV), jnp.float32),
            wvT=std * jax.random.normal(keys[ki + 2], (D, DKV), jnp.float32),
            woT=std_small * jax.random.normal(keys[ki + 3], (D, D), jnp.float32),
            w1T=std * jax.random.normal(keys[ki + 4], (D, HID), jnp.float32),
            w2T=std * jax.random.normal(keys[ki + 5], (HID, D), jnp.float32),
            w3T=std_small * jax.random.normal(keys[ki + 6], (D, HID), jnp.float32),
        ))
        ki += 7

    # rotary tables (per-pair; shared by real/imag halves in split-half layout)
    cos_pair, sin_pair = precompute_freqs(HD, MAXSEQ)
    cos_pair, sin_pair = cos_pair[:S], sin_pair[:S]              # (S, HD//2)

    params = prepare_params(layers, emb, norm_w, cos_pair, sin_pair, NH=NH, NKV=NKV)

    # ---- Pallas forward (single fused kernel) ----
    h = emb[tokens]                                              # embedding gather (glue)
    # TODO(synk): dropout is identity (p=0.0, inference) and is omitted.
    logits = transformer_forward_pallas(h, params, NH=NH, NKV=NKV, eps=EPS)  # (B,1,V)
    logits = jax.block_until_ready(logits)

    # ---- validate against pure-JAX f32 reference of the PyTorch forward ----
    # (tolerance loosened vs. the all-f32 version because matmuls use bf16
    #  operands with f32 accumulation, as recommended by the perf review.)
    ref = ref_forward(tokens, emb, layers, norm_w, cos_pair, sin_pair,
                      NH=NH, NKV=NKV, eps=EPS)
    err = float(jnp.max(jnp.abs(logits - ref)))
    assert err < 2e-2, f"max abs error too large: {err}"

    print("KERNEL_OK")
</pallas_src>

<mosaic_0001>
module attributes {stable_mosaic.version = 11 : i64} {
  func.func @kernel(%arg0: i32, %arg1: i32, %arg2: memref<1x8x64xf32, #tpu.memory_space<vmem>>, %arg3: memref<8x8xf32, #tpu.memory_space<vmem>>, %arg4: memref<8x8xf32, #tpu.memory_space<vmem>>, %arg5: memref<1x1x64xf32, #tpu.memory_space<vmem>>, %arg6: memref<1x4x64x16xbf16, #tpu.memory_space<vmem>>, %arg7: memref<1x2x64x16xbf16, #tpu.memory_space<vmem>>, %arg8: memref<1x2x64x16xbf16, #tpu.memory_space<vmem>>, %arg9: memref<1x64x64xbf16, #tpu.memory_space<vmem>>, %arg10: memref<1x1x64xf32, #tpu.memory_space<vmem>>, %arg11: memref<1x64x128xbf16, #tpu.memory_space<vmem>>, %arg12: memref<1x128x64xbf16, #tpu.memory_space<vmem>>, %arg13: memref<1x64x128xbf16, #tpu.memory_space<vmem>>, %arg14: memref<1x64xf32, #tpu.memory_space<vmem>>, %arg15: memref<64x256xbf16, #tpu.memory_space<vmem>>, %arg16: memref<1x1x256xf32, #tpu.memory_space<vmem>>, %arg17: memref<8x64xf32, #tpu.memory_space<vmem>>) attributes {dimension_semantics = [#tpu.dimension_semantics<parallel>, #tpu.dimension_semantics<arbitrary>], iteration_bounds = array<i64: 2, 2>, scalar_prefetch = 0 : i64, scratch_operands = 1 : i64, tpu.core_type = #tpu.core_type<tc>, window_params = [{transform_indices = @transform_0, window_bounds = array<i64: 1, 8, 64>}, {pipeline_mode = #tpu.pipeline_mode<synchronous>, transform_indices = @transform_1, window_bounds = array<i64: 8, 8>}, {pipeline_mode = #tpu.pipeline_mode<synchronous>, transform_indices = @transform_2, window_bounds = array<i64: 8, 8>}, {transform_indices = @transform_3, window_bounds = array<i64: 1, 1, 64>}, {transform_indices = @transform_4, window_bounds = array<i64: 1, 4, 64, 16>}, {transform_indices = @transform_5, window_bounds = array<i64: 1, 2, 64, 16>}, {transform_indices = @transform_6, window_bounds = array<i64: 1, 2, 64, 16>}, {transform_indices = @transform_7, window_bounds = array<i64: 1, 64, 64>}, {transform_indices = @transform_8, window_bounds = array<i64: 1, 1, 64>}, {transform_indices = @transform_9, window_bounds = array<i64: 1, 64, 128>}, {transform_indices = @transform_10, window_bounds = array<i64: 1, 128, 64>}, {transform_indices = @transform_11, window_bounds = array<i64: 1, 64, 128>}, {pipeline_mode = #tpu.pipeline_mode<synchronous>, transform_indices = @transform_12, window_bounds = array<i64: 1, 64>}, {pipeline_mode = #tpu.pipeline_mode<synchronous>, transform_indices = @transform_13, window_bounds = array<i64: 64, 256>}, {transform_indices = @transform_14, window_bounds = array<i64: 1, 1, 256>}]} {
    %c0_i32 = arith.constant 0 : i32
    %0 = arith.cmpi eq, %arg1, %c0_i32 : i32
    %1 = arith.extui %0 : i1 to i32
    %c0_i32_0 = arith.constant 0 : i32
    %2 = arith.cmpi ne, %1, %c0_i32_0 : i32
    scf.if %2 {
      %c0_58 = arith.constant 0 : index
      %c0_59 = arith.constant 0 : index
      %c0_60 = arith.constant 0 : index
      %149 = vector.load %arg2[%c0_58, %c0_59, %c0_60] : memref<1x8x64xf32, #tpu.memory_space<vmem>>, vector<1x8x64xf32>
      %150 = vector.shape_cast %149 : vector<1x8x64xf32> to vector<8x64xf32>
      %c0_61 = arith.constant 0 : index
      %c0_62 = arith.constant 0 : index
      %151 = vector.load %arg17[%c0_61, %c0_62] : memref<8x64xf32, #tpu.memory_space<vmem>>, vector<8x64xf32>
      tpu.vector_store %arg17[%c0_61, %c0_62], %150 {strides = array<i32>} : memref<8x64xf32, #tpu.memory_space<vmem>>, vector<8x64xf32>,
    } else {
    }
    %c0 = arith.constant 0 : index
    %c0_1 = arith.constant 0 : index
    %3 = vector.load %arg17[%c0, %c0_1] : memref<8x64xf32, #tpu.memory_space<vmem>>, vector<8x64xf32>
    %c0_2 = arith.constant 0 : index
    %c0_3 = arith.constant 0 : index
    %c0_4 = arith.constant 0 : index
    %4 = vector.load %arg5[%c0_2, %c0_3, %c0_4] : memref<1x1x64xf32, #tpu.memory_space<vmem>>, vector<1x1x64xf32>
    %5 = vector.shape_cast %4 : vector<1x1x64xf32> to vector<1x64xf32>
    %6 = arith.mulf %3, %3 : vector<8x64xf32>
    %cst = arith.constant dense<0.000000e+00> : vector<8xf32>
    %7 = vector.multi_reduction <add>, %6, %cst [1] : vector<8x64xf32> to vector<8xf32>
    %8 = vector.shape_cast %7 : vector<8xf32> to vector<8x1xf32>
    %cst_5 = arith.constant 6.400000e+01 : f32
    %9 = vector.broadcast %cst_5 : f32 to vector<8x1xf32>
    %10 = arith.divf %8, %9 : vector<8x1xf32>
    %cst_6 = arith.constant 9.99999974E-6 : f32
    %11 = vector.broadcast %cst_6 : f32 to vector<8x1xf32>
    %12 = arith.addf %10, %11 : vector<8x1xf32>
    %13 = math.rsqrt %12 : vector<8x1xf32>
    %14 = vector.broadcast %13 : vector<8x1xf32> to vector<8x64xf32>
    %15 = arith.mulf %3, %14 : vector<8x64xf32>
    %16 = vector.broadcast %5 : vector<1x64xf32> to vector<8x64xf32>
    %17 = arith.mulf %15, %16 : vector<8x64xf32>
    %18 = arith.truncf %17 : vector<8x64xf32> to vector<8x64xbf16>
    %19 = vector.shape_cast %18 : vector<8x64xbf16> to vector<1x8x64xbf16>
    %20 = vector.shape_cast %19 : vector<1x8x64xbf16> to vector<1x8x64xbf16>
    %21 = vector.broadcast %20 : vector<1x8x64xbf16> to vector<4x8x64xbf16>
    %22 = vector.shape_cast %18 : vector<8x64xbf16> to vector<1x8x64xbf16>
    %23 = vector.shape_cast %22 : vector<1x8x64xbf16> to vector<1x8x64xbf16>
    %24 = vector.broadcast %23 : vector<1x8x64xbf16> to vector<2x8x64xbf16>
    %c0_7 = arith.constant 0 : index
    %c0_8 = arith.constant 0 : index
    %c0_9 = arith.constant 0 : index
    %c0_10 = arith.constant 0 : index
    %25 = vector.load %arg6[%c0_7, %c0_8, %c0_9, %c0_10] : memref<1x4x64x16xbf16, #tpu.memory_space<vmem>>, vector<1x4x64x16xbf16>
    %26 = vector.shape_cast %25 : vector<1x4x64x16xbf16> to vector<4x64x16xbf16>
    "tpu.trace_start"() <{level = 10 : i32, message = "hsd,hdk->hsk"}> : () -> ()
    %cst_11 = arith.constant dense<0.000000e+00> : vector<4x8x16xf32>
    %27 = tpu.matmul %21, %26, %cst_11 {dimension_numbers = #tpu.dot_dimension_numbers<[2], [1], [1], [2], [0, 0, 0, 1, 1, 2], [0], [0]>} : vector<4x8x64xbf16>, vector<4x64x16xbf16>, vector<4x8x16xf32> -> vector<4x8x16xf32>
    "tpu.trace_stop"() : () -> ()
    %c0_12 = arith.constant 0 : index
    %c0_13 = arith.constant 0 : index
    %c0_14 = arith.constant 0 : index
    %c0_15 = arith.constant 0 : index
    %28 = vector.load %arg7[%c0_12, %c0_13, %c0_14, %c0_15] : memref<1x2x64x16xbf16, #tpu.memory_space<vmem>>, vector<1x2x64x16xbf16>
    %29 = vector.shape_cast %28 : vector<1x2x64x16xbf16> to vector<2x64x16xbf16>
    "tpu.trace_start"() <{level = 10 : i32, message = "hsd,hdk->hsk"}> : () -> ()
    %cst_16 = arith.constant dense<0.000000e+00> : vector<2x8x16xf32>
    %30 = tpu.matmul %24, %29, %cst_16 {dimension_numbers = #tpu.dot_dimension_numbers<[2], [1], [1], [2], [0, 0, 0, 1, 1, 2], [0], [0]>} : vector<2x8x64xbf16>, vector<2x64x16xbf16>, vector<2x8x16xf32> -> vector<2x8x16xf32>
    "tpu.trace_stop"() : () -> ()
    %c0_17 = arith.constant 0 : index
    %c0_18 = arith.constant 0 : index
    %c0_19 = arith.constant 0 : index
    %c0_20 = arith.constant 0 : index
    %31 = vector.load %arg8[%c0_17, %c0_18, %c0_19, %c0_20] : memref<1x2x64x16xbf16, #tpu.memory_space<vmem>>, vector<1x2x64x16xbf16>
    %32 = vector.shape_cast %31 : vector<1x2x64x16xbf16> to vector<2x64x16xbf16>
    "tpu.trace_start"() <{level = 10 : i32, message = "hsd,hdk->hsk"}> : () -> ()
    %cst_21 = arith.constant dense<0.000000e+00> : vector<2x8x16xf32>
    %33 = tpu.matmul %24, %32, %cst_21 {dimension_numbers = #tpu.dot_dimension_numbers<[2], [1], [1], [2], [0, 0, 0, 1, 1, 2], [0], [0]>} : vector<2x8x64xbf16>, vector<2x64x16xbf16>, vector<2x8x16xf32> -> vector<2x8x16xf32>
    "tpu.trace_stop"() : () -> ()
    %c0_22 = arith.constant 0 : index
    %c0_23 = arith.constant 0 : index
    %34 = vector.load %arg3[%c0_22, %c0_23] : memref<8x8xf32, #tpu.memory_space<vmem>>, vector<8x8xf32>
    %35 = vector.shape_cast %34 : vector<8x8xf32> to vector<1x8x8xf32>
    %c0_24 = arith.constant 0 : index
    %c0_25 = arith.constant 0 : index
    %36 = vector.load %arg4[%c0_24, %c0_25] : memref<8x8xf32, #tpu.memory_space<vmem>>, vector<8x8xf32>
    %37 = vector.shape_cast %36 : vector<8x8xf32> to vector<1x8x8xf32>
    %38 = vector.extract_strided_slice %27 {offsets = [0, 0, 0], sizes = [4, 8, 8], strides = [1, 1, 1]} : vector<4x8x16xf32> to vector<4x8x8xf32>
    %39 = vector.extract_strided_slice %27 {offsets = [0, 0, 8], sizes = [4, 8, 8], strides = [1, 1, 1]} : vector<4x8x16xf32> to vector<4x8x8xf32>
    %40 = vector.broadcast %35 : vector<1x8x8xf32> to vector<4x8x8xf32>
    %41 = arith.mulf %38, %40 : vector<4x8x8xf32>
    %42 = vector.broadcast %37 : vector<1x8x8xf32> to vector<4x8x8xf32>
    %43 = arith.mulf %39, %42 : vector<4x8x8xf32>
    %44 = arith.subf %41, %43 : vector<4x8x8xf32>
    %45 = vector.broadcast %37 : vector<1x8x8xf32> to vector<4x8x8xf32>
    %46 = arith.mulf %38, %45 : vector<4x8x8xf32>
    %47 = vector.broadcast %35 : vector<1x8x8xf32> to vector<4x8x8xf32>
    %48 = arith.mulf %39, %47 : vector<4x8x8xf32>
    %49 = arith.addf %46, %48 : vector<4x8x8xf32>
    %50 = tpu.concatenate %44, %49 in 2 : vector<4x8x8xf32>, vector<4x8x8xf32> -> vector<4x8x16xf32>
    %cst_26 = arith.constant 2.500000e-01 : f32
    %51 = vector.broadcast %cst_26 : f32 to vector<4x8x16xf32>
    %52 = arith.mulf %50, %51 : vector<4x8x16xf32>
    %53 = vector.extract_strided_slice %30 {offsets = [0, 0, 0], sizes = [2, 8, 8], strides = [1, 1, 1]} : vector<2x8x16xf32> to vector<2x8x8xf32>
    %54 = vector.extract_strided_slice %30 {offsets = [0, 0, 8], sizes = [2, 8, 8], strides = [1, 1, 1]} : vector<2x8x16xf32> to vector<2x8x8xf32>
    %55 = vector.broadcast %35 : vector<1x8x8xf32> to vector<2x8x8xf32>
    %56 = arith.mulf %53, %55 : vector<2x8x8xf32>
    %57 = vector.broadcast %37 : vector<1x8x8xf32> to vector<2x8x8xf32>
    %58 = arith.mulf %54, %57 : vector<2x8x8xf32>
    %59 = arith.subf %56, %58 : vector<2x8x8xf32>
    %60 = vector.broadcast %37 : vector<1x8x8xf32> to vector<2x8x8xf32>
    %61 = arith.mulf %53, %60 : vector<2x8x8xf32>
    %62 = vector.broadcast %35 : vector<1x8x8xf32> to vector<2x8x8xf32>
    %63 = arith.mulf %54, %62 : vector<2x8x8xf32>
    %64 = arith.addf %61, %63 : vector<2x8x8xf32>
    %65 = tpu.concatenate %59, %64 in 2 : vector<2x8x8xf32>, vector<2x8x8xf32> -> vector<2x8x16xf32>
    %66 = vector.shape_cast %65 : vector<2x8x16xf32> to vector<2x1x8x16xf32>
    %67 = vector.shape_cast %66 : vector<2x1x8x16xf32> to vector<2x1x8x16xf32>
    %68 = vector.broadcast %67 : vector<2x1x8x16xf32> to vector<2x2x8x16xf32>
    %69 = vector.shape_cast %68 : vector<2x2x8x16xf32> to vector<4x8x16xf32>
    %70 = vector.shape_cast %33 : vector<2x8x16xf32> to vector<2x1x8x16xf32>
    %71 = vector.shape_cast %70 : vector<2x1x8x16xf32> to vector<2x1x8x16xf32>
    %72 = vector.broadcast %71 : vector<2x1x8x16xf32> to vector<2x2x8x16xf32>
    %73 = vector.shape_cast %72 : vector<2x2x8x16xf32> to vector<4x8x16xf32>
    %74 = arith.truncf %52 : vector<4x8x16xf32> to vector<4x8x16xbf16>
    %75 = arith.truncf %69 : vector<4x8x16xf32> to vector<4x8x16xbf16>
    "tpu.trace_start"() <{level = 10 : i32, message = "hqd,hkd->hqk"}> : () -> ()
    %cst_27 = arith.constant dense<0.000000e+00> : vector<4x8x8xf32>
    %76 = tpu.matmul %74, %75, %cst_27 {dimension_numbers = #tpu.dot_dimension_numbers<[2], [2], [1], [1], [0, 0, 0, 1, 1, 1], [0], [0]>} : vector<4x8x16xbf16>, vector<4x8x16xbf16>, vector<4x8x8xf32> -> vector<4x8x8xf32>
    "tpu.trace_stop"() : () -> ()
    %77 = tpu.iota {dimensions = array<i32: 0>} : vector<8x8xi32>
    %78 = tpu.iota {dimensions = array<i32: 1>} : vector<8x8xi32>
    %79 = arith.cmpi sle, %78, %77 : vector<8x8xi32>
    %80 = vector.shape_cast %79 : vector<8x8xi1> to vector<1x8x8xi1>
    %cst_28 = arith.constant 0xFF800000 : f32
    %81 = vector.shape_cast %80 : vector<1x8x8xi1> to vector<1x8x8xi1>
    %82 = vector.broadcast %81 : vector<1x8x8xi1> to vector<4x8x8xi1>
    %83 = vector.broadcast %cst_28 : f32 to vector<4x8x8xf32>
    %84 = arith.select %82, %76, %83 : vector<4x8x8xi1>, vector<4x8x8xf32>
    %cst_29 = arith.constant dense<0xFF800000> : vector<4x8xf32>
    %85 = vector.multi_reduction <maximumf>, %84, %cst_29 [2] : vector<4x8x8xf32> to vector<4x8xf32>
    %86 = vector.shape_cast %85 : vector<4x8xf32> to vector<4x8x1xf32>
    %87 = vector.broadcast %86 : vector<4x8x1xf32> to vector<4x8x8xf32>
    %88 = arith.subf %84, %87 : vector<4x8x8xf32>
    %89 = math.exp %88 : vector<4x8x8xf32>
    %cst_30 = arith.constant dense<0.000000e+00> : vector<4x8xf32>
    %90 = vector.multi_reduction <add>, %89, %cst_30 [2] : vector<4x8x8xf32> to vector<4x8xf32>
    %91 = vector.shape_cast %90 : vector<4x8xf32> to vector<4x8x1xf32>
    %92 = tpu.reciprocal %91 {approx = true} : vector<4x8x1xf32> -> vector<4x8x1xf32>
    %93 = vector.broadcast %92 : vector<4x8x1xf32> to vector<4x8x8xf32>
    %94 = arith.mulf %89, %93 : vector<4x8x8xf32>
    %95 = arith.truncf %94 : vector<4x8x8xf32> to vector<4x8x8xbf16>
    %96 = arith.truncf %73 : vector<4x8x16xf32> to vector<4x8x16xbf16>
    "tpu.trace_start"() <{level = 10 : i32, message = "hqk,hkd->hqd"}> : () -> ()
    %cst_31 = arith.constant dense<0.000000e+00> : vector<4x8x16xf32>
    %97 = tpu.matmul %95, %96, %cst_31 {dimension_numbers = #tpu.dot_dimension_numbers<[2], [1], [1], [2], [0, 0, 0, 1, 1, 2], [0], [0]>} : vector<4x8x8xbf16>, vector<4x8x16xbf16>, vector<4x8x16xf32> -> vector<4x8x16xf32>
    "tpu.trace_stop"() : () -> ()
    %98 = vector.extract_strided_slice %97 {offsets = [0, 0, 0], sizes = [1, 8, 16], strides = [1, 1, 1]} : vector<4x8x16xf32> to vector<1x8x16xf32>
    %99 = vector.shape_cast %98 : vector<1x8x16xf32> to vector<8x16xf32>
    %100 = vector.extract_strided_slice %97 {offsets = [1, 0, 0], sizes = [1, 8, 16], strides = [1, 1, 1]} : vector<4x8x16xf32> to vector<1x8x16xf32>
    %101 = vector.shape_cast %100 : vector<1x8x16xf32> to vector<8x16xf32>
    %102 = vector.extract_strided_slice %97 {offsets = [2, 0, 0], sizes = [1, 8, 16], strides = [1, 1, 1]} : vector<4x8x16xf32> to vector<1x8x16xf32>
    %103 = vector.shape_cast %102 : vector<1x8x16xf32> to vector<8x16xf32>
    %104 = vector.extract_strided_slice %97 {offsets = [3, 0, 0], sizes = [1, 8, 16], strides = [1, 1, 1]} : vector<4x8x16xf32> to vector<1x8x16xf32>
    %105 = vector.shape_cast %104 : vector<1x8x16xf32> to vector<8x16xf32>
    %106 = tpu.concatenate %99, %101, %103, %105 in 1 : vector<8x16xf32>, vector<8x16xf32>, vector<8x16xf32>, vector<8x16xf32> -> vector<8x64xf32>
    %107 = arith.truncf %106 : vector<8x64xf32> to vector<8x64xbf16>
    %c0_32 = arith.constant 0 : index
    %c0_33 = arith.constant 0 : index
    %c0_34 = arith.constant 0 : index
    %108 = vector.load %arg9[%c0_32, %c0_33, %c0_34] : memref<1x64x64xbf16, #tpu.memory_space<vmem>>, vector<1x64x64xbf16>
    %109 = vector.shape_cast %108 : vector<1x64x64xbf16> to vector<64x64xbf16>
    %cst_35 = arith.constant dense<0.000000e+00> : vector<8x64xf32>
    %110 = tpu.matmul %107, %109, %cst_35 {dimension_numbers = #tpu.dot_dimension_numbers<[1], [0], [0], [1], [0, 0, 1, 1], [], []>} : vector<8x64xbf16>, vector<64x64xbf16>, vector<8x64xf32> -> vector<8x64xf32>
    %111 = arith.addf %3, %110 : vector<8x64xf32>
    %c0_36 = arith.constant 0 : index
    %c0_37 = arith.constant 0 : index
    %c0_38 = arith.constant 0 : index
    %112 = vector.load %arg10[%c0_36, %c0_37, %c0_38] : memref<1x1x64xf32, #tpu.memory_space<vmem>>, vector<1x1x64xf32>
    %113 = vector.shape_cast %112 : vector<1x1x64xf32> to vector<1x64xf32>
    %114 = arith.mulf %111, %111 : vector<8x64xf32>
    %cst_39 = arith.constant dense<0.000000e+00> : vector<8xf32>
    %115 = vector.multi_reduction <add>, %114, %cst_39 [1] : vector<8x64xf32> to vector<8xf32>
    %116 = vector.shape_cast %115 : vector<8xf32> to vector<8x1xf32>
    %cst_40 = arith.constant 6.400000e+01 : f32
    %117 = vector.broadcast %cst_40 : f32 to vector<8x1xf32>
    %118 = arith.divf %116, %117 : vector<8x1xf32>
    %cst_41 = arith.constant 9.99999974E-6 : f32
    %119 = vector.broadcast %cst_41 : f32 to vector<8x1xf32>
    %120 = arith.addf %118, %119 : vector<8x1xf32>
    %121 = math.rsqrt %120 : vector<8x1xf32>
    %122 = vector.broadcast %121 : vector<8x1xf32> to vector<8x64xf32>
    %123 = arith.mulf %111, %122 : vector<8x64xf32>
    %124 = vector.broadcast %113 : vector<1x64xf32> to vector<8x64xf32>
    %125 = arith.mulf %123, %124 : vector<8x64xf32>
    %126 = arith.truncf %125 : vector<8x64xf32> to vector<8x64xbf16>
    %c0_42 = arith.constant 0 : index
    %c0_43 = arith.constant 0 : index
    %c0_44 = arith.constant 0 : index
    %127 = vector.load %arg11[%c0_42, %c0_43, %c0_44] : memref<1x64x128xbf16, #tpu.memory_space<vmem>>, vector<1x64x128xbf16>
    %128 = vector.shape_cast %127 : vector<1x64x128xbf16> to vector<64x128xbf16>
    %cst_45 = arith.constant dense<0.000000e+00> : vector<8x128xf32>
    %129 = tpu.matmul %126, %128, %cst_45 {dimension_numbers = #tpu.dot_dimension_numbers<[1], [0], [0], [1], [0, 0, 1, 1], [], []>} : vector<8x64xbf16>, vector<64x128xbf16>, vector<8x128xf32> -> vector<8x128xf32>
    %c0_46 = arith.constant 0 : index
    %c0_47 = arith.constant 0 : index
    %c0_48 = arith.constant 0 : index
    %130 = vector.load %arg13[%c0_46, %c0_47, %c0_48] : memref<1x64x128xbf16, #tpu.memory_space<vmem>>, vector<1x64x128xbf16>
    %131 = vector.shape_cast %130 : vector<1x64x128xbf16> to vector<64x128xbf16>
    %cst_49 = arith.constant dense<0.000000e+00> : vector<8x128xf32>
    %132 = tpu.matmul %126, %131, %cst_49 {dimension_numbers = #tpu.dot_dimension_numbers<[1], [0], [0], [1], [0, 0, 1, 1], [], []>} : vector<8x64xbf16>, vector<64x128xbf16>, vector<8x128xf32> -> vector<8x128xf32>
    %133 = arith.negf %129 : vector<8x128xf32>
    %134 = math.exp %133 : vector<8x128xf32>
    %cst_50 = arith.constant 1.000000e+00 : f32
    %135 = vector.broadcast %cst_50 : f32 to vector<8x128xf32>
    %136 = arith.addf %135, %134 : vector<8x128xf32>
    %137 = arith.divf %135, %136 : vector<8x128xf32>
    %138 = arith.mulf %129, %137 : vector<8x128xf32>
    %139 = arith.mulf %138, %132 : vector<8x128xf32>
    %140 = arith.truncf %139 : vector<8x128xf32> to vector<8x128xbf16>
    %c0_51 = arith.constant 0 : index
    %c0_52 = arith.constant 0 : index
    %c0_53 = arith.constant 0 : index
    %141 = vector.load %arg12[%c0_51, %c0_52, %c0_53] : memref<1x128x64xbf16, #tpu.memory_space<vmem>>, vector<1x128x64xbf16>
    %142 = vector.shape_cast %141 : vector<1x128x64xbf16> to vector<128x64xbf16>
    %cst_54 = arith.constant dense<0.000000e+00> : vector<8x64xf32>
    %143 = tpu.matmul %140, %142, %cst_54 {dimension_numbers = #tpu.dot_dimension_numbers<[1], [0], [0], [1], [0, 0, 1, 1], [], []>} : vector<8x128xbf16>, vector<128x64xbf16>, vector<8x64xf32> -> vector<8x64xf32>
    %144 = arith.addf %111, %143 : vector<8x64xf32>
    %c0_55 = arith.constant 0 : index
    %c0_56 = arith.constant 0 : index
    %145 = vector.load %arg17[%c0_55, %c0_56] : memref<8x64xf32, #tpu.memory_space<vmem>>, vector<8x64xf32>
    tpu.vector_store %arg17[%c0_55, %c0_56], %144 {strides = array<i32>} : memref<8x64xf32, #tpu.memory_space<vmem>>, vector<8x64xf32>,
    %c1_i32 = arith.constant 1 : i32
    %146 = arith.cmpi eq, %arg1, %c1_i32 : i32
    %147 = arith.extui %146 : i1 to i32
    %c0_i32_57 = arith.constant 0 : i32
    %148 = arith.cmpi ne, %147, %c0_i32_57 : i32
    scf.if %148 {
      %149 = vector.extract_strided_slice %144 {offsets = [7, 0], sizes = [1, 64], strides = [1, 1]} : vector<8x64xf32> to vector<1x64xf32>
      %c0_58 = arith.constant 0 : index
      %c0_59 = arith.constant 0 : index
      %150 = vector.load %arg14[%c0_58, %c0_59] : memref<1x64xf32, #tpu.memory_space<vmem>>, vector<1x64xf32>
      %151 = arith.mulf %149, %149 : vector<1x64xf32>
      %cst_60 = arith.constant dense<0.000000e+00> : vector<1xf32>
      %152 = vector.multi_reduction <add>, %151, %cst_60 [1] : vector<1x64xf32> to vector<1xf32>
      %153 = vector.shape_cast %152 : vector<1xf32> to vector<1x1xf32>
      %cst_61 = arith.constant 6.400000e+01 : f32
      %154 = vector.broadcast %cst_61 : f32 to vector<1x1xf32>
      %155 = arith.divf %153, %154 : vector<1x1xf32>
      %cst_62 = arith.constant 9.99999974E-6 : f32
      %156 = vector.broadcast %cst_62 : f32 to vector<1x1xf32>
      %157 = arith.addf %155, %156 : vector<1x1xf32>
      %158 = math.rsqrt %157 : vector<1x1xf32>
      %159 = vector.broadcast %158 : vector<1x1xf32> to vector<1x64xf32>
      %160 = arith.mulf %149, %159 : vector<1x64xf32>
      %161 = arith.mulf %160, %150 : vector<1x64xf32>
      %162 = arith.truncf %161 : vector<1x64xf32> to vector<1x64xbf16>
      %c0_63 = arith.constant 0 : index
      %c0_64 = arith.constant 0 : index
      %163 = vector.load %arg15[%c0_63, %c0_64] : memref<64x256xbf16, #tpu.memory_space<vmem>>, vector<64x256xbf16>
      %cst_65 = arith.constant dense<0.000000e+00> : vector<1x256xf32>
      %164 = tpu.matmul %162, %163, %cst_65 {dimension_numbers = #tpu.dot_dimension_numbers<[1], [0], [0], [1], [0, 0, 1, 1], [], []>} : vector<1x64xbf16>, vector<64x256xbf16>, vector<1x256xf32> -> vector<1x256xf32>
      %c0_66 = arith.constant 0 : index
      %c0_67 = arith.constant 0 : index
      %c0_68 = arith.constant 0 : index
      %165 = vector.load %arg16[%c0_66, %c0_67, %c0_68] : memref<1x1x256xf32, #tpu.memory_space<vmem>>, vector<1x1x256xf32>
      %166 = vector.shape_cast %165 : vector<1x1x256xf32> to vector<1x256xf32>
      %167 = vector.shape_cast %164 : vector<1x256xf32> to vector<1x1x256xf32>
      tpu.vector_store %arg16[%c0_66, %c0_67, %c0_68], %167 {strides = array<i32>} : memref<1x1x256xf32, #tpu.memory_space<vmem>>, vector<1x1x256xf32>,
    } else {
    }
    return
  }
  func.func @transform_0(%arg0: i32, %arg1: i32) -> (i32, i32, i32) {
    %c0_i32 = arith.constant 0 : i32
    %c0_i32_0 = arith.constant 0 : i32
    %c0_i32_1 = arith.constant 0 : i32
    return %arg0, %c0_i32, %c0_i32_0 : i32, i32, i32
  }
  func.func @transform_1(%arg0: i32, %arg1: i32) -> (i32, i32) {
    %c0_i32 = arith.constant 0 : i32
    %c0_i32_0 = arith.constant 0 : i32
    %c0_i32_1 = arith.constant 0 : i32
    return %c0_i32, %c0_i32_0 : i32, i32
  }
  func.func @transform_2(%arg0: i32, %arg1: i32) -> (i32, i32) {
    %c0_i32 = arith.constant 0 : i32
    %c0_i32_0 = arith.constant 0 : i32
    %c0_i32_1 = arith.constant 0 : i32
    return %c0_i32, %c0_i32_0 : i32, i32
  }
  func.func @transform_3(%arg0: i32, %arg1: i32) -> (i32, i32, i32) {
    %c0_i32 = arith.constant 0 : i32
    %c0_i32_0 = arith.constant 0 : i32
    %c0_i32_1 = arith.constant 0 : i32
    return %arg1, %c0_i32, %c0_i32_0 : i32, i32, i32
  }
  func.func @transform_4(%arg0: i32, %arg1: i32) -> (i32, i32, i32, i32) {
    %c0_i32 = arith.constant 0 : i32
    %c0_i32_0 = arith.constant 0 : i32
    %c0_i32_1 = arith.constant 0 : i32
    %c0_i32_2 = arith.constant 0 : i32
    return %arg1, %c0_i32, %c0_i32_0, %c0_i32_1 : i32, i32, i32, i32
  }
  func.func @transform_5(%arg0: i32, %arg1: i32) -> (i32, i32, i32, i32) {
    %c0_i32 = arith.constant 0 : i32
    %c0_i32_0 = arith.constant 0 : i32
    %c0_i32_1 = arith.constant 0 : i32
    %c0_i32_2 = arith.constant 0 : i32
    return %arg1, %c0_i32, %c0_i32_0, %c0_i32_1 : i32, i32, i32, i32
  }
  func.func @transform_6(%arg0: i32, %arg1: i32) -> (i32, i32, i32, i32) {
    %c0_i32 = arith.constant 0 : i32
    %c0_i32_0 = arith.constant 0 : i32
    %c0_i32_1 = arith.constant 0 : i32
    %c0_i32_2 = arith.constant 0 : i32
    return %arg1, %c0_i32, %c0_i32_0, %c0_i32_1 : i32, i32, i32, i32
  }
  func.func @transform_7(%arg0: i32, %arg1: i32) -> (i32, i32, i32) {
    %c0_i32 = arith.constant 0 : i32
    %c0_i32_0 = arith.constant 0 : i32
    %c0_i32_1 = arith.constant 0 : i32
    return %arg1, %c0_i32, %c0_i32_0 : i32, i32, i32
  }
  func.func @transform_8(%arg0: i32, %arg1: i32) -> (i32, i32, i32) {
    %c0_i32 = arith.constant 0 : i32
    %c0_i32_0 = arith.constant 0 : i32
    %c0_i32_1 = arith.constant 0 : i32
    return %arg1, %c0_i32, %c0_i32_0 : i32, i32, i32
  }
  func.func @transform_9(%arg0: i32, %arg1: i32) -> (i32, i32, i32) {
    %c0_i32 = arith.constant 0 : i32
    %c0_i32_0 = arith.constant 0 : i32
    %c0_i32_1 = arith.constant 0 : i32
    return %arg1, %c0_i32, %c0_i32_0 : i32, i32, i32
  }
  func.func @transform_10(%arg0: i32, %arg1: i32) -> (i32, i32, i32) {
    %c0_i32 = arith.constant 0 : i32
    %c0_i32_0 = arith.constant 0 : i32
    %c0_i32_1 = arith.constant 0 : i32
    return %arg1, %c0_i32, %c0_i32_0 : i32, i32, i32
  }
  func.func @transform_11(%arg0: i32, %arg1: i32) -> (i32, i32, i32) {
    %c0_i32 = arith.constant 0 : i32
    %c0_i32_0 = arith.constant 0 : i32
    %c0_i32_1 = arith.constant 0 : i32
    return %arg1, %c0_i32, %c0_i32_0 : i32, i32, i32
  }
  func.func @transform_12(%arg0: i32, %arg1: i32) -> (i32, i32) {
    %c0_i32 = arith.constant 0 : i32
    %c0_i32_0 = arith.constant 0 : i32
    %c0_i32_1 = arith.constant 0 : i32
    return %c0_i32, %c0_i32_0 : i32, i32
  }
  func.func @transform_13(%arg0: i32, %arg1: i32) -> (i32, i32) {
    %c0_i32 = arith.constant 0 : i32
    %c0_i32_0 = arith.constant 0 : i32
    %c0_i32_1 = arith.constant 0 : i32
    return %c0_i32, %c0_i32_0 : i32, i32
  }
  func.func @transform_14(%arg0: i32, %arg1: i32) -> (i32, i32, i32) {
    %c0_i32 = arith.constant 0 : i32
    %c0_i32_0 = arith.constant 0 : i32
    %c0_i32_1 = arith.constant 0 : i32
    return %arg0, %c0_i32, %c0_i32_0 : i32, i32, i32
  }
}

</mosaic_0001>

<llo_original>
// kernel: tpu_custom_call.1
$region0: #{tpu_custom_call.1}
  #allocation0 [shape = 'u32[]', space=smem, size = 0x4, offset = 0x4, fixed_abs, tag = 'smem constant byte address 0x4 - core index']
  #allocation1 [shape = 'u32[144,128]{1,0:T(1,128)}', space=vmem, size = 0x12000, scoped, tag = 'internal scratch']
  #allocation2 [shape = 'f32[8,64]{1,0:T(8,128)}', space=vmem, size = 0x1000, scoped, tag = 'scratch operand']
  %s0 = inlined_call_operand.vmem [shape: f32[2,8,64], index: 0, kind: input, shape index: {}]
  %s1 = inlined_call_operand.vmem [shape: f32[8,8], index: 1, kind: input, shape index: {}]
  %s2 = inlined_call_operand.vmem [shape: f32[8,8], index: 2, kind: input, shape index: {}]
  %s3 = inlined_call_operand.vmem [shape: f32[2,1,64], index: 3, kind: input, shape index: {}]
  %s4 = inlined_call_operand.vmem [shape: bf16[2,4,64,16], index: 4, kind: input, shape index: {}]
  %s5 = inlined_call_operand.vmem [shape: bf16[2,2,64,16], index: 5, kind: input, shape index: {}]
  %s6 = inlined_call_operand.vmem [shape: bf16[2,2,64,16], index: 6, kind: input, shape index: {}]
  %s7 = inlined_call_operand.vmem [shape: bf16[2,64,64], index: 7, kind: input, shape index: {}]
  %s8 = inlined_call_operand.vmem [shape: f32[2,1,64], index: 8, kind: input, shape index: {}]
  %s9 = inlined_call_operand.vmem [shape: bf16[2,64,128], index: 9, kind: input, shape index: {}]
  %s10 = inlined_call_operand.vmem [shape: bf16[2,128,64], index: 10, kind: input, shape index: {}]
  %s11 = inlined_call_operand.vmem [shape: bf16[2,64,128], index: 11, kind: input, shape index: {}]
  %s12 = inlined_call_operand.vmem [shape: f32[1,64], index: 12, kind: input, shape index: {}]
  %s13 = inlined_call_operand.vmem [shape: bf16[64,256], index: 13, kind: input, shape index: {}]
  %s14 = inlined_call_operand.hbm [shape: f32[2,1,256], index: 14, kind: output, shape index: {}]
  %s15 = sld [smem:[#allocation0]]
  $region97: #{tpu_custom_call.1} parent=0
    _
  %s17 = ssub.s32 1, %s15
  %s18 = scalar_select 0, %s17, %s15
  $region1: #{tpu_custom_call.1} parent=0
    #allocation3 [shape = 'u8[2048]{0}', space=vmem, size = 0x800, scoped, tag = 'output window, operand 0']
    #allocation4 [shape = 's32[2]{0}', space=sflag, size = 0x8, scoped, tag = 'scoped memory for tpu_custom_call.1']
    %19 = vsyncpa [#allocation4], 0
    %s20 = scalar_lea.sflag [#allocation4], 1
    %21 = vsyncpa %s20, 0
    loop: start=0, step=1, limit=6
    $region2: #{tpu_custom_call.1} parent=1 // loop_pre_header
      _
    $region3: #{tpu_custom_call.1} parent=1 // loop_header
      %s23 = sphi 0, %s27
      %p24 = scmp.ge.s32.totalorder %s23, 6
      %s30 = sphi 0, %s42
      %s31 = sphi 0, %s38
      %s32 = sphi 0, %s30
      %s33 = sphi 0, %s31
      %s34 = sphi 0, %s32
      %s35 = sphi 0, %s33
      %s45 = sphi 0, %s47
      %s48 = sphi 0, %s45
      %s49 = sphi 0, %s48
      %s65 = sphi 0, %s49
      %s69 = sphi 0, %s69
      %s71 = sphi 0, %s69
      %s72 = sphi 0, %s71
      %s86 = sphi 0, %s72
      %s90 = sphi 0, %s90
      %s92 = sphi 0, %s90
      %s93 = sphi 0, %s92
      %s107 = sphi 0, %s93
      %s113 = sphi 0, %s115
      %s116 = sphi 0, %s113
      %s117 = sphi 0, %s116
      %s133 = sphi 0, %s117
      %s139 = sphi 0, %s141
      %s142 = sphi 0, %s139
      %s143 = sphi 0, %s142
      %s159 = sphi 0, %s143
      %s165 = sphi 0, %s167
      %s168 = sphi 0, %s165
      %s169 = sphi 0, %s168
      %s185 = sphi 0, %s169
      %s191 = sphi 0, %s193
      %s194 = sphi 0, %s191
      %s195 = sphi 0, %s194
      %s211 = sphi 0, %s195
      %s217 = sphi 0, %s219
      %s220 = sphi 0, %s217
      %s221 = sphi 0, %s220
      %s237 = sphi 0, %s221
      %s243 = sphi 0, %s245
      %s246 = sphi 0, %s243
      %s247 = sphi 0, %s246
      %s263 = sphi 0, %s247
      %s269 = sphi 0, %s271
      %s272 = sphi 0, %s269
      %s273 = sphi 0, %s272
      %s289 = sphi 0, %s273
      %s295 = sphi 0, %s297
      %s298 = sphi 0, %s295
      %s299 = sphi 0, %s298
      %s315 = sphi 0, %s299
      %s321 = sphi 0, %s323
      %s324 = sphi 0, %s321
      %s325 = sphi 0, %s324
      %s341 = sphi 0, %s325
      %s345 = sphi 0, %s345
      %s347 = sphi 0, %s345
      %s348 = sphi 0, %s347
      %s362 = sphi 0, %s348
      %s366 = sphi 0, %s366
      %s368 = sphi 0, %s366
      %s369 = sphi 0, %s368
      %s383 = sphi 0, %s369
      %s389 = sphi 0, %s391
      %s392 = sphi 0, %s389
      %s393 = sphi 0, %s392
      %s409 = sphi 0, %s393
    $region4: #{tpu_custom_call.1} parent=1 // loop_header_branch
      %26 = sbr.rel (%p24) target = $region8
    $region5: #{tpu_custom_call.1} parent=1 // loop_body
      %s28 = ssub.s32 %s23, 1
      %s29 = ssub.s32 %s23, 2
      %s36 = sadd.s32 1, %s31
      %p37 = scmp.ge.s32.totalorder %s36, 2
      %s38 = scalar_select %p37, 0, %s36
      %s39 = sadd.s32 1, %s30
      %s40 = scalar_select %p37, %s39, %s30
      %p41 = scmp.ge.s32.totalorder %s40, 2
      %s42 = scalar_select %p41, 0, %s40
      %s43 = ssub.s32 %s30, %s42
      %p44 = scmp.eq.s32.totalorder %s43, 0
      %s46 = sadd.s32 %s45, 1
      %s47 = scalar_select %p44, %s45, %s46
      %p50 = pneg %p44
      %p51 = scmp.eq.s32.totalorder %s23, 3
      %p52 = por %p50, %p51
      %p53 = scmp.ne.s32.totalorder %s45, %s48
      %p54 = scmp.eq.s32.totalorder %s23, 0
      %p55 = por %p53, %p54
      %p56 = scmp.ne.s32.totalorder %s45, %s48
      %p57 = scmp.eq.s32.totalorder %s28, 3
      %p58 = por %p56, %p57
      %p59 = scmp.ne.s32.totalorder %s48, %s49
      %p60 = scmp.eq.s32.totalorder %s28, 0
      %p61 = por %p59, %p60
      %p62 = scmp.ne.s32.totalorder %s48, %s49
      %p63 = scmp.eq.s32.totalorder %s29, 3
      %p64 = por %p62, %p63
      %p66 = scmp.ne.s32.totalorder %s49, %s65
      %p67 = scmp.eq.s32.totalorder %s29, 0
      %p68 = por %p66, %p67
      %s70 = sadd.s32 %s69, 1
      %p73 = scmp.eq.s32.totalorder %s23, 3
      %p74 = scmp.ne.s32.totalorder %s69, %s71
      %p75 = scmp.eq.s32.totalorder %s23, 0
      %p76 = por %p74, %p75
      %p77 = scmp.ne.s32.totalorder %s69, %s71
      %p78 = scmp.eq.s32.totalorder %s28, 3
      %p79 = por %p77, %p78
      %p80 = scmp.ne.s32.totalorder %s71, %s72
      %p81 = scmp.eq.s32.totalorder %s28, 0
      %p82 = por %p80, %p81
      %p83 = scmp.ne.s32.totalorder %s71, %s72
      %p84 = scmp.eq.s32.totalorder %s29, 3
      %p85 = por %p83, %p84
      %p87 = scmp.ne.s32.totalorder %s72, %s86
      %p88 = scmp.eq.s32.totalorder %s29, 0
      %p89 = por %p87, %p88
      %s91 = sadd.s32 %s90, 1
      %p94 = scmp.eq.s32.totalorder %s23, 3
      %p95 = scmp.ne.s32.totalorder %s90, %s92
      %p96 = scmp.eq.s32.totalorder %s23, 0
      %p97 = por %p95, %p96
      %p98 = scmp.ne.s32.totalorder %s90, %s92
      %p99 = scmp.eq.s32.totalorder %s28, 3
      %p100 = por %p98, %p99
      %p101 = scmp.ne.s32.totalorder %s92, %s93
      %p102 = scmp.eq.s32.totalorder %s28, 0
      %p103 = por %p101, %p102
      %p104 = scmp.ne.s32.totalorder %s92, %s93
      %p105 = scmp.eq.s32.totalorder %s29, 3
      %p106 = por %p104, %p105
      %p108 = scmp.ne.s32.totalorder %s93, %s107
      %p109 = scmp.eq.s32.totalorder %s29, 0
      %p110 = por %p108, %p109
      %s111 = ssub.s32 %s31, %s38
      %p112 = scmp.eq.s32.totalorder %s111, 0
      %s114 = sadd.s32 %s113, 1
      %s115 = scalar_select %p112, %s113, %s114
      %p118 = pneg %p112
      %p119 = scmp.eq.s32.totalorder %s23, 3
      %p120 = por %p118, %p119
      %p121 = scmp.ne.s32.totalorder %s113, %s116
      %p122 = scmp.eq.s32.totalorder %s23, 0
      %p123 = por %p121, %p122
      %p124 = scmp.ne.s32.totalorder %s113, %s116
      %p125 = scmp.eq.s32.totalorder %s28, 3
      %p126 = por %p124, %p125
      %p127 = scmp.ne.s32.totalorder %s116, %s117
      %p128 = scmp.eq.s32.totalorder %s28, 0
      %p129 = por %p127, %p128
      %p130 = scmp.ne.s32.totalorder %s116, %s117
      %p131 = scmp.eq.s32.totalorder %s29, 3
      %p132 = por %p130, %p131
      %p134 = scmp.ne.s32.totalorder %s117, %s133
      %p135 = scmp.eq.s32.totalorder %s29, 0
      %p136 = por %p134, %p135
      %s137 = ssub.s32 %s31, %s38
      %p138 = scmp.eq.s32.totalorder %s137, 0
      %s140 = sadd.s32 %s139, 1
      %s141 = scalar_select %p138, %s139, %s140
      %p144 = pneg %p138
      %p145 = scmp.eq.s32.totalorder %s23, 3
      %p146 = por %p144, %p145
      %p147 = scmp.ne.s32.totalorder %s139, %s142
      %p148 = scmp.eq.s32.totalorder %s23, 0
      %p149 = por %p147, %p148
      %p150 = scmp.ne.s32.totalorder %s139, %s142
      %p151 = scmp.eq.s32.totalorder %s28, 3
      %p152 = por %p150, %p151
      %p153 = scmp.ne.s32.totalorder %s142, %s143
      %p154 = scmp.eq.s32.totalorder %s28, 0
      %p155 = por %p153, %p154
      %p156 = scmp.ne.s32.totalorder %s142, %s143
      %p157 = scmp.eq.s32.totalorder %s29, 3
      %p158 = por %p156, %p157
      %p160 = scmp.ne.s32.totalorder %s143, %s159
      %p161 = scmp.eq.s32.totalorder %s29, 0
      %p162 = por %p160, %p161
      %s163 = ssub.s32 %s31, %s38
      %p164 = scmp.eq.s32.totalorder %s163, 0
      %s166 = sadd.s32 %s165, 1
      %s167 = scalar_select %p164, %s165, %s166
      %p170 = pneg %p164
      %p171 = scmp.eq.s32.totalorder %s23, 3
      %p172 = por %p170, %p171
      %p173 = scmp.ne.s32.totalorder %s165, %s168
      %p174 = scmp.eq.s32.totalorder %s23, 0
      %p175 = por %p173, %p174
      %p176 = scmp.ne.s32.totalorder %s165, %s168
      %p177 = scmp.eq.s32.totalorder %s28, 3
      %p178 = por %p176, %p177
      %p179 = scmp.ne.s32.totalorder %s168, %s169
      %p180 = scmp.eq.s32.totalorder %s28, 0
      %p181 = por %p179, %p180
      %p182 = scmp.ne.s32.totalorder %s168, %s169
      %p183 = scmp.eq.s32.totalorder %s29, 3
      %p184 = por %p182, %p183
      %p186 = scmp.ne.s32.totalorder %s169, %s185
      %p187 = scmp.eq.s32.totalorder %s29, 0
      %p188 = por %p186, %p187
      %s189 = ssub.s32 %s31, %s38
      %p190 = scmp.eq.s32.totalorder %s189, 0
      %s192 = sadd.s32 %s191, 1
      %s193 = scalar_select %p190, %s191, %s192
      %p196 = pneg %p190
      %p197 = scmp.eq.s32.totalorder %s23, 3
      %p198 = por %p196, %p197
      %p199 = scmp.ne.s32.totalorder %s191, %s194
      %p200 = scmp.eq.s32.totalorder %s23, 0
      %p201 = por %p199, %p200
      %p202 = scmp.ne.s32.totalorder %s191, %s194
      %p203 = scmp.eq.s32.totalorder %s28, 3
      %p204 = por %p202, %p203
      %p205 = scmp.ne.s32.totalorder %s194, %s195
      %p206 = scmp.eq.s32.totalorder %s28, 0
      %p207 = por %p205, %p206
      %p208 = scmp.ne.s32.totalorder %s194, %s195
      %p209 = scmp.eq.s32.totalorder %s29, 3
      %p210 = por %p208, %p209
      %p212 = scmp.ne.s32.totalorder %s195, %s211
      %p213 = scmp.eq.s32.totalorder %s29, 0
      %p214 = por %p212, %p213
      %s215 = ssub.s32 %s31, %s38
      %p216 = scmp.eq.s32.totalorder %s215, 0
      %s218 = sadd.s32 %s217, 1
      %s219 = scalar_select %p216, %s217, %s218
      %p222 = pneg %p216
      %p223 = scmp.eq.s32.totalorder %s23, 3
      %p224 = por %p222, %p223
      %p225 = scmp.ne.s32.totalorder %s217, %s220
      %p226 = scmp.eq.s32.totalorder %s23, 0
      %p227 = por %p225, %p226
      %p228 = scmp.ne.s32.totalorder %s217, %s220
      %p229 = scmp.eq.s32.totalorder %s28, 3
      %p230 = por %p228, %p229
      %p231 = scmp.ne.s32.totalorder %s220, %s221
      %p232 = scmp.eq.s32.totalorder %s28, 0
      %p233 = por %p231, %p232
      %p234 = scmp.ne.s32.totalorder %s220, %s221
      %p235 = scmp.eq.s32.totalorder %s29, 3
      %p236 = por %p234, %p235
      %p238 = scmp.ne.s32.totalorder %s221, %s237
      %p239 = scmp.eq.s32.totalorder %s29, 0
      %p240 = por %p238, %p239
      %s241 = ssub.s32 %s31, %s38
      %p242 = scmp.eq.s32.totalorder %s241, 0
      %s244 = sadd.s32 %s243, 1
      %s245 = scalar_select %p242, %s243, %s244
      %p248 = pneg %p242
      %p249 = scmp.eq.s32.totalorder %s23, 3
      %p250 = por %p248, %p249
      %p251 = scmp.ne.s32.totalorder %s243, %s246
      %p252 = scmp.eq.s32.totalorder %s23, 0
      %p253 = por %p251, %p252
      %p254 = scmp.ne.s32.totalorder %s243, %s246
      %p255 = scmp.eq.s32.totalorder %s28, 3
      %p256 = por %p254, %p255
      %p257 = scmp.ne.s32.totalorder %s246, %s247
      %p258 = scmp.eq.s32.totalorder %s28, 0
      %p259 = por %p257, %p258
      %p260 = scmp.ne.s32.totalorder %s246, %s247
      %p261 = scmp.eq.s32.totalorder %s29, 3
      %p262 = por %p260, %p261
      %p264 = scmp.ne.s32.totalorder %s247, %s263
      %p265 = scmp.eq.s32.totalorder %s29, 0
      %p266 = por %p264, %p265
      %s267 = ssub.s32 %s31, %s38
      %p268 = scmp.eq.s32.totalorder %s267, 0
      %s270 = sadd.s32 %s269, 1
      %s271 = scalar_select %p268, %s269, %s270
      %p274 = pneg %p268
      %p275 = scmp.eq.s32.totalorder %s23, 3
      %p276 = por %p274, %p275
      %p277 = scmp.ne.s32.totalorder %s269, %s272
      %p278 = scmp.eq.s32.totalorder %s23, 0
      %p279 = por %p277, %p278
      %p280 = scmp.ne.s32.totalorder %s269, %s272
      %p281 = scmp.eq.s32.totalorder %s28, 3
      %p282 = por %p280, %p281
      %p283 = scmp.ne.s32.totalorder %s272, %s273
      %p284 = scmp.eq.s32.totalorder %s28, 0
      %p285 = por %p283, %p284
      %p286 = scmp.ne.s32.totalorder %s272, %s273
      %p287 = scmp.eq.s32.totalorder %s29, 3
      %p288 = por %p286, %p287
      %p290 = scmp.ne.s32.totalorder %s273, %s289
      %p291 = scmp.eq.s32.totalorder %s29, 0
      %p292 = por %p290, %p291
      %s293 = ssub.s32 %s31, %s38
      %p294 = scmp.eq.s32.totalorder %s293, 0
      %s296 = sadd.s32 %s295, 1
      %s297 = scalar_select %p294, %s295, %s296
      %p300 = pneg %p294
      %p301 = scmp.eq.s32.totalorder %s23, 3
      %p302 = por %p300, %p301
      %p303 = scmp.ne.s32.totalorder %s295, %s298
      %p304 = scmp.eq.s32.totalorder %s23, 0
      %p305 = por %p303, %p304
      %p306 = scmp.ne.s32.totalorder %s295, %s298
      %p307 = scmp.eq.s32.totalorder %s28, 3
      %p308 = por %p306, %p307
      %p309 = scmp.ne.s32.totalorder %s298, %s299
      %p310 = scmp.eq.s32.totalorder %s28, 0
      %p311 = por %p309, %p310
      %p312 = scmp.ne.s32.totalorder %s298, %s299
      %p313 = scmp.eq.s32.totalorder %s29, 3
      %p314 = por %p312, %p313
      %p316 = scmp.ne.s32.totalorder %s299, %s315
      %p317 = scmp.eq.s32.totalorder %s29, 0
      %p318 = por %p316, %p317
      %s319 = ssub.s32 %s31, %s38
      %p320 = scmp.eq.s32.totalorder %s319, 0
      %s322 = sadd.s32 %s321, 1
      %s323 = scalar_select %p320, %s321, %s322
      %p326 = pneg %p320
      %p327 = scmp.eq.s32.totalorder %s23, 3
      %p328 = por %p326, %p327
      %p329 = scmp.ne.s32.totalorder %s321, %s324
      %p330 = scmp.eq.s32.totalorder %s23, 0
      %p331 = por %p329, %p330
      %p332 = scmp.ne.s32.totalorder %s321, %s324
      %p333 = scmp.eq.s32.totalorder %s28, 3
      %p334 = por %p332, %p333
      %p335 = scmp.ne.s32.totalorder %s324, %s325
      %p336 = scmp.eq.s32.totalorder %s28, 0
      %p337 = por %p335, %p336
      %p338 = scmp.ne.s32.totalorder %s324, %s325
      %p339 = scmp.eq.s32.totalorder %s29, 3
      %p340 = por %p338, %p339
      %p342 = scmp.ne.s32.totalorder %s325, %s341
      %p343 = scmp.eq.s32.totalorder %s29, 0
      %p344 = por %p342, %p343
      %s346 = sadd.s32 %s345, 1
      %p349 = scmp.eq.s32.totalorder %s23, 3
      %p350 = scmp.ne.s32.totalorder %s345, %s347
      %p351 = scmp.eq.s32.totalorder %s23, 0
      %p352 = por %p350, %p351
      %p353 = scmp.ne.s32.totalorder %s345, %s347
      %p354 = scmp.eq.s32.totalorder %s28, 3
      %p355 = por %p353, %p354
      %p356 = scmp.ne.s32.totalorder %s347, %s348
      %p357 = scmp.eq.s32.totalorder %s28, 0
      %p358 = por %p356, %p357
      %p359 = scmp.ne.s32.totalorder %s347, %s348
      %p360 = scmp.eq.s32.totalorder %s29, 3
      %p361 = por %p359, %p360
      %p363 = scmp.ne.s32.totalorder %s348, %s362
      %p364 = scmp.eq.s32.totalorder %s29, 0
      %p365 = por %p363, %p364
      %s367 = sadd.s32 %s366, 1
      %p370 = scmp.eq.s32.totalorder %s23, 3
      %p371 = scmp.ne.s32.totalorder %s366, %s368
      %p372 = scmp.eq.s32.totalorder %s23, 0
      %p373 = por %p371, %p372
      %p374 = scmp.ne.s32.totalorder %s366, %s368
      %p375 = scmp.eq.s32.totalorder %s28, 3
      %p376 = por %p374, %p375
      %p377 = scmp.ne.s32.totalorder %s368, %s369
      %p378 = scmp.eq.s32.totalorder %s28, 0
      %p379 = por %p377, %p378
      %p380 = scmp.ne.s32.totalorder %s368, %s369
      %p381 = scmp.eq.s32.totalorder %s29, 3
      %p382 = por %p380, %p381
      %p384 = scmp.ne.s32.totalorder %s369, %s383
      %p385 = scmp.eq.s32.totalorder %s29, 0
      %p386 = por %p384, %p385
      %s387 = ssub.s32 %s30, %s42
      %p388 = scmp.eq.s32.totalorder %s387, 0
      %s390 = sadd.s32 %s389, 1
      %s391 = scalar_select %p388, %s389, %s390
      %p394 = pneg %p388
      %p395 = scmp.eq.s32.totalorder %s23, 3
      %p396 = por %p394, %p395
      %p397 = scmp.ne.s32.totalorder %s389, %s392
      %p398 = scmp.eq.s32.totalorder %s23, 0
      %p399 = por %p397, %p398
      %p400 = scmp.ne.s32.totalorder %s389, %s392
      %p401 = scmp.eq.s32.totalorder %s28, 3
      %p402 = por %p400, %p401
      %p403 = scmp.ne.s32.totalorder %s392, %s393
      %p404 = scmp.eq.s32.totalorder %s28, 0
      %p405 = por %p403, %p404
      %p406 = scmp.ne.s32.totalorder %s392, %s393
      %p407 = scmp.eq.s32.totalorder %s29, 3
      %p408 = por %p406, %p407
      %p410 = scmp.ne.s32.totalorder %s393, %s409
      %p411 = scmp.eq.s32.totalorder %s29, 0
      %p412 = por %p410, %p411
      %p413 = scmp.le.s32.totalorder 1, %s23
      %p414 = scmp.lt.s32.totalorder %s23, 5
      %p415 = pnand %p413, %p414
      %p416 = pneg %p415
      // Predicated region
      $region9: #{tpu_custom_call.1} parent=5 // pred_check
        _
      $region10: #{tpu_custom_call.1} parent=5 // pred_check_branch
        %418 = sbr.rel (%p415) target = $region12
      $region11: #{tpu_custom_call.1} parent=5 // pred_region
        %s419 = ssub.s32 %s23, 1
        // Predicated region
        $region13: #{tpu_custom_call.1} parent=11 // pred_check
          %p420 = pneg %p82
        $region14: #{tpu_custom_call.1} parent=11 // pred_check_branch
          %422 = sbr.rel (%p420) target = $region16
        $region15: #{tpu_custom_call.1} parent=11 // pred_region
          _
        $region16: #{tpu_custom_call.1} parent=11 // pred_fallthru
          _
        // Predicated region
        $region17: #{tpu_custom_call.1} parent=11 // pred_check
          %p423 = pneg %p103
        $region18: #{tpu_custom_call.1} parent=11 // pred_check_branch
          %425 = sbr.rel (%p423) target = $region20
        $region19: #{tpu_custom_call.1} parent=11 // pred_region
          _
        $region20: #{tpu_custom_call.1} parent=11 // pred_fallthru
          _
        // Predicated region
        $region21: #{tpu_custom_call.1} parent=11 // pred_check
          %p426 = pneg %p358
        $region22: #{tpu_custom_call.1} parent=11 // pred_check_branch
          %428 = sbr.rel (%p426) target = $region24
        $region23: #{tpu_custom_call.1} parent=11 // pred_region
          _
        $region24: #{tpu_custom_call.1} parent=11 // pred_fallthru
          _
        // Predicated region
        $region25: #{tpu_custom_call.1} parent=11 // pred_check
          %p429 = pneg %p379
        $region26: #{tpu_custom_call.1} parent=11 // pred_check_branch
          %431 = sbr.rel (%p429) target = $region28
        $region27: #{tpu_custom_call.1} parent=11 // pred_region
          _
        $region28: #{tpu_custom_call.1} parent=11 // pred_fallthru
          _
      $region12: #{tpu_custom_call.1} parent=5 // pred_fallthru
        _
      %p432 = scmp.lt.s32.totalorder %s23, 4
      // Predicated region
      $region29: #{tpu_custom_call.1} parent=5 // pred_check
        %p433 = pneg %p432
      $region30: #{tpu_custom_call.1} parent=5 // pred_check_branch
        %435 = sbr.rel (%p433) target = $region32
      $region31: #{tpu_custom_call.1} parent=5 // pred_region
        // Predicated region
        $region33: #{tpu_custom_call.1} parent=31 // pred_check
          %p436 = pneg %p55
        $region34: #{tpu_custom_call.1} parent=31 // pred_check_branch
          %438 = sbr.rel (%p436) target = $region36
        $region35: #{tpu_custom_call.1} parent=31 // pred_region
          %p439 = scmp.lt.s32.totalorder %s30, 1
          %s440 = scalar_select %p439, %s30, 1
          %s441 = smul.addr %s440, 8
          %s442 = scalar_lea.vmem %s0, %s441
        $region36: #{tpu_custom_call.1} parent=31 // pred_fallthru
          _
        // Predicated region
        $region37: #{tpu_custom_call.1} parent=31 // pred_check
          %p443 = pneg %p123
        $region38: #{tpu_custom_call.1} parent=31 // pred_check_branch
          %445 = sbr.rel (%p443) target = $region40
        $region39: #{tpu_custom_call.1} parent=31 // pred_region
          %p446 = scmp.lt.s32.totalorder %s31, 1
          %s447 = scalar_select %p446, %s31, 1
          %s448 = scalar_lea.vmem %s3, %s447
        $region40: #{tpu_custom_call.1} parent=31 // pred_fallthru
          _
        // Predicated region
        $region41: #{tpu_custom_call.1} parent=31 // pred_check
          %p449 = pneg %p149
        $region42: #{tpu_custom_call.1} parent=31 // pred_check_branch
          %451 = sbr.rel (%p449) target = $region44
        $region43: #{tpu_custom_call.1} parent=31 // pred_region
          %p452 = scmp.lt.s32.totalorder %s31, 1
          %s453 = scalar_select %p452, %s31, 1
          %s454 = smul.addr %s453, 32
          %s455 = smul.addr %s454, 4
          %s456 = scalar_lea.vmem %s4, %s455
        $region44: #{tpu_custom_call.1} parent=31 // pred_fallthru
          _
        // Predicated region
        $region45: #{tpu_custom_call.1} parent=31 // pred_check
          %p457 = pneg %p175
        $region46: #{tpu_custom_call.1} parent=31 // pred_check_branch
          %459 = sbr.rel (%p457) target = $region48
        $region47: #{tpu_custom_call.1} parent=31 // pred_region
          %p460 = scmp.lt.s32.totalorder %s31, 1
          %s461 = scalar_select %p460, %s31, 1
          %s462 = smul.addr %s461, 16
          %s463 = smul.addr %s462, 4
          %s464 = scalar_lea.vmem %s5, %s463
        $region48: #{tpu_custom_call.1} parent=31 // pred_fallthru
          _
        // Predicated region
        $region49: #{tpu_custom_call.1} parent=31 // pred_check
          %p465 = pneg %p201
        $region50: #{tpu_custom_call.1} parent=31 // pred_check_branch
          %467 = sbr.rel (%p465) target = $region52
        $region51: #{tpu_custom_call.1} parent=31 // pred_region
          %p468 = scmp.lt.s32.totalorder %s31, 1
          %s469 = scalar_select %p468, %s31, 1
          %s470 = smul.addr %s469, 16
          %s471 = smul.addr %s470, 4
          %s472 = scalar_lea.vmem %s6, %s471
        $region52: #{tpu_custom_call.1} parent=31 // pred_fallthru
          _
        // Predicated region
        $region53: #{tpu_custom_call.1} parent=31 // pred_check
          %p473 = pneg %p227
        $region54: #{tpu_custom_call.1} parent=31 // pred_check_branch
          %475 = sbr.rel (%p473) target = $region56
        $region55: #{tpu_custom_call.1} parent=31 // pred_region
          %p476 = scmp.lt.s32.totalorder %s31, 1
          %s477 = scalar_select %p476, %s31, 1
          %s478 = smul.addr %s477, 8
          %s479 = smul.addr %s478, 4
          %s480 = scalar_lea.vmem %s7, %s479
        $region56: #{tpu_custom_call.1} parent=31 // pred_fallthru
          _
        // Predicated region
        $region57: #{tpu_custom_call.1} parent=31 // pred_check
          %p481 = pneg %p253
        $region58: #{tpu_custom_call.1} parent=31 // pred_check_branch
          %483 = sbr.rel (%p481) target = $region60
        $region59: #{tpu_custom_call.1} parent=31 // pred_region
          %p484 = scmp.lt.s32.totalorder %s31, 1
          %s485 = scalar_select %p484, %s31, 1
          %s486 = scalar_lea.vmem %s8, %s485
        $region60: #{tpu_custom_call.1} parent=31 // pred_fallthru
          _
        // Predicated region
        $region61: #{tpu_custom_call.1} parent=31 // pred_check
          %p487 = pneg %p279
        $region62: #{tpu_custom_call.1} parent=31 // pred_check_branch
          %489 = sbr.rel (%p487) target = $region64
        $region63: #{tpu_custom_call.1} parent=31 // pred_region
          %p490 = scmp.lt.s32.totalorder %s31, 1
          %s491 = scalar_select %p490, %s31, 1
          %s492 = smul.addr %s491, 8
          %s493 = smul.addr %s492, 4
          %s494 = scalar_lea.vmem %s9, %s493
        $region64: #{tpu_custom_call.1} parent=31 // pred_fallthru
          _
        // Predicated region
        $region65: #{tpu_custom_call.1} parent=31 // pred_check
          %p495 = pneg %p305
        $region66: #{tpu_custom_call.1} parent=31 // pred_check_branch
          %497 = sbr.rel (%p495) target = $region68
        $region67: #{tpu_custom_call.1} parent=31 // pred_region
          %p498 = scmp.lt.s32.totalorder %s31, 1
          %s499 = scalar_select %p498, %s31, 1
          %s500 = smul.addr %s499, 16
          %s501 = smul.addr %s500, 4
          %s502 = scalar_lea.vmem %s10, %s501
        $region68: #{tpu_custom_call.1} parent=31 // pred_fallthru
          _
        // Predicated region
        $region69: #{tpu_custom_call.1} parent=31 // pred_check
          %p503 = pneg %p331
        $region70: #{tpu_custom_call.1} parent=31 // pred_check_branch
          %505 = sbr.rel (%p503) target = $region72
        $region71: #{tpu_custom_call.1} parent=31 // pred_region
          %p506 = scmp.lt.s32.totalorder %s31, 1
          %s507 = scalar_select %p506, %s31, 1
          %s508 = smul.addr %s507, 8
          %s509 = smul.addr %s508, 4
          %s510 = scalar_lea.vmem %s11, %s509
        $region72: #{tpu_custom_call.1} parent=31 // pred_fallthru
          _
      $region32: #{tpu_custom_call.1} parent=5 // pred_fallthru
        _
      %p511 = scmp.le.s32.totalorder 1, %s23
      %p512 = scmp.lt.s32.totalorder %s23, 5
      %p513 = pnand %p511, %p512
      %p514 = pneg %p513
      // Predicated region
      $region73: #{tpu_custom_call.1} parent=5 // pred_check
        _
      $region74: #{tpu_custom_call.1} parent=5 // pred_check_branch
        %516 = sbr.rel (%p513) target = $region76
      $region75: #{tpu_custom_call.1} parent=5 // pred_region
        %s517 = ssub.s32 %s23, 1
        %p518 = scmp.lt.s32.totalorder %s32, 1
        %s519 = scalar_select %p518, %s32, 1
        %s520 = smul.addr %s519, 8
        %s521 = scalar_lea.vmem %s0, %s520
        %p522 = pneg %p61
        %p523 = pneg %p58
        %p524 = pneg %p82
        %p525 = pneg %p79
        %p526 = pneg %p103
        %p527 = pneg %p100
        %p528 = scmp.lt.s32.totalorder %s33, 1
        %s529 = scalar_select %p528, %s33, 1
        %s530 = scalar_lea.vmem %s3, %s529
        %p531 = pneg %p129
        %p532 = pneg %p126
        %p533 = scmp.lt.s32.totalorder %s33, 1
        %s534 = scalar_select %p533, %s33, 1
        %s535 = smul.addr %s534, 32
        %s536 = smul.addr %s535, 4
        %s537 = scalar_lea.vmem %s4, %s536
        %p538 = pneg %p155
        %p539 = pneg %p152
        %p540 = scmp.lt.s32.totalorder %s33, 1
        %s541 = scalar_select %p540, %s33, 1
        %s542 = smul.addr %s541, 16
        %s543 = smul.addr %s542, 4
        %s544 = scalar_lea.vmem %s5, %s543
        %p545 = pneg %p181
        %p546 = pneg %p178
        %p547 = scmp.lt.s32.totalorder %s33, 1
        %s548 = scalar_select %p547, %s33, 1
        %s549 = smul.addr %s548, 16
        %s550 = smul.addr %s549, 4
        %s551 = scalar_lea.vmem %s6, %s550
        %p552 = pneg %p207
        %p553 = pneg %p204
        %p554 = scmp.lt.s32.totalorder %s33, 1
        %s555 = scalar_select %p554, %s33, 1
        %s556 = smul.addr %s555, 8
        %s557 = smul.addr %s556, 4
        %s558 = scalar_lea.vmem %s7, %s557
        %p559 = pneg %p233
        %p560 = pneg %p230
        %p561 = scmp.lt.s32.totalorder %s33, 1
        %s562 = scalar_select %p561, %s33, 1
        %s563 = scalar_lea.vmem %s8, %s562
        %p564 = pneg %p259
        %p565 = pneg %p256
        %p566 = scmp.lt.s32.totalorder %s33, 1
        %s567 = scalar_select %p566, %s33, 1
        %s568 = smul.addr %s567, 8
        %s569 = smul.addr %s568, 4
        %s570 = scalar_lea.vmem %s9, %s569
        %p571 = pneg %p285
        %p572 = pneg %p282
        %p573 = scmp.lt.s32.totalorder %s33, 1
        %s574 = scalar_select %p573, %s33, 1
        %s575 = smul.addr %s574, 16
        %s576 = smul.addr %s575, 4
        %s577 = scalar_lea.vmem %s10, %s576
        %p578 = pneg %p311
        %p579 = pneg %p308
        %p580 = scmp.lt.s32.totalorder %s33, 1
        %s581 = scalar_select %p580, %s33, 1
        %s582 = smul.addr %s581, 8
        %s583 = smul.addr %s582, 4
        %s584 = scalar_lea.vmem %s11, %s583
        %p585 = pneg %p337
        %p586 = pneg %p334
        %p587 = pneg %p358
        %p588 = pneg %p355
        %p589 = pneg %p379
        %p590 = pneg %p376
        %p591 = pneg %p405
        %p592 = pneg %p402
        %s593 = sand.u32 %s392, 1
        %s594 = scalar_lea.sflag [#allocation4], %s593
        %s595 = sand.u32 %s392, 1
        %s596 = smul.addr %s595, 2
        %s597 = scalar_lea.vmem [#allocation3], %s596
        %p598 = scmp.lt.s32.totalorder %s32, 1
        %s599 = scalar_select %p598, %s32, 1
        %s600 = smul.addr %s599, 8
        %s601 = scalar_lea.vmem %s0, %s600
        %p602 = scmp.lt.s32.totalorder %s33, 1
        %s603 = scalar_select %p602, %s33, 1
        %s604 = scalar_lea.vmem %s3, %s603
        %p605 = scmp.lt.s32.totalorder %s33, 1
        %s606 = scalar_select %p605, %s33, 1
        %s607 = smul.addr %s606, 32
        %s608 = smul.addr %s607, 4
        %s609 = scalar_lea.vmem %s4, %s608
        %p610 = scmp.lt.s32.totalorder %s33, 1
        %s611 = scalar_select %p610, %s33, 1
        %s612 = smul.addr %s611, 16
        %s613 = smul.addr %s612, 4
        %s614 = scalar_lea.vmem %s5, %s613
        %p615 = scmp.lt.s32.totalorder %s33, 1
        %s616 = scalar_select %p615, %s33, 1
        %s617 = smul.addr %s616, 16
        %s618 = smul.addr %s617, 4
        %s619 = scalar_lea.vmem %s6, %s618
        %p620 = scmp.lt.s32.totalorder %s33, 1
        %s621 = scalar_select %p620, %s33, 1
        %s622 = smul.addr %s621, 8
        %s623 = smul.addr %s622, 4
        %s624 = scalar_lea.vmem %s7, %s623
        %p625 = scmp.lt.s32.totalorder %s33, 1
        %s626 = scalar_select %p625, %s33, 1
        %s627 = scalar_lea.vmem %s8, %s626
        %p628 = scmp.lt.s32.totalorder %s33, 1
        %s629 = scalar_select %p628, %s33, 1
        %s630 = smul.addr %s629, 8
        %s631 = smul.addr %s630, 4
        %s632 = scalar_lea.vmem %s9, %s631
        %p633 = scmp.lt.s32.totalorder %s33, 1
        %s634 = scalar_select %p633, %s33, 1
        %s635 = smul.addr %s634, 16
        %s636 = smul.addr %s635, 4
        %s637 = scalar_lea.vmem %s10, %s636
        %p638 = scmp.lt.s32.totalorder %s33, 1
        %s639 = scalar_select %p638, %s33, 1
        %s640 = smul.addr %s639, 8
        %s641 = smul.addr %s640, 4
        %s642 = scalar_lea.vmem %s11, %s641
        %p644 = scmp.eq.s32.totalorder %s33, 0
        // Predicated region
        $region77: #{tpu_custom_call.1} parent=75 // pred_check
          %p645 = pneg %p644
        $region78: #{tpu_custom_call.1} parent=75 // pred_check_branch
          %647 = sbr.rel (%p645) target = $region80
        $region79: #{tpu_custom_call.1} parent=75 // pred_region
          %v648 = vld [vmem:[%s601] sm:$0xff]
          %vm649 = vcmask 523264
          %650 = vst.msk [vmem:[#allocation2] sm:$0xff] %vm649, %v648
        $region80: #{tpu_custom_call.1} parent=75 // pred_fallthru
          _
        %v651 = vld [vmem:[#allocation2] sm:$0xff]
        %v652 = vld [vmem:[%s604] sm:$0x1]
        %v653 = vmul.f32 %v651, %v651
        %vm654 = vcmask 523264
        %v655 = vsel %vm654, %v653, 0.0
        %656 = vadd.xlane.f32.xlu0 %v655
        %v657 = vpop.xlane.xlu0 %656
        %v658 = vrcp.pop 64.0
        %v659 = vmul.f32 %v657, %v658
        %v660 = vadd.f32 %v659, 1e-05
        %v661 = vrsqrt.pop %v660
        %v662 = vmul.f32 %v651, %v661
        %v664 = vlaneseq
        %v665 = vshrl.u32 %v664, 7
        %v666 = vsub.s32 0, %v665
        %v667 = vrot.slane %v652, %v666
        %v669 = vmul.f32 %v662, %v667
        %v670 = vpack.c.bf16 %v669, %v669
        %v671 = vld [vmem:[%s609] sm:$0xf]
        %v672 = vld [vmem:[%s609 + $0x4] sm:$0xf]
        %v673 = vld [vmem:[%s609 + $0x8] sm:$0xf]
        %v674 = vld [vmem:[%s609 + $0xc] sm:$0xf]
        %v675 = vld [vmem:[%s609 + $0x10] sm:$0xf]
        %v676 = vld [vmem:[%s609 + $0x14] sm:$0xf]
        %v677 = vld [vmem:[%s609 + $0x18] sm:$0xf]
        %v678 = vld [vmem:[%s609 + $0x1c] sm:$0xf]
        %v679 = vld [vmem:[%s609 + $0x20] sm:$0xf]
        %v680 = vld [vmem:[%s609 + $0x24] sm:$0xf]
        %v681 = vld [vmem:[%s609 + $0x28] sm:$0xf]
        %v682 = vld [vmem:[%s609 + $0x2c] sm:$0xf]
        %v683 = vld [vmem:[%s609 + $0x30] sm:$0xf]
        %v684 = vld [vmem:[%s609 + $0x34] sm:$0xf]
        %v685 = vld [vmem:[%s609 + $0x38] sm:$0xf]
        %v686 = vld [vmem:[%s609 + $0x3c] sm:$0xf]
        %v687 = vld [vmem:[%s609 + $0x40] sm:$0xf]
        %v688 = vld [vmem:[%s609 + $0x44] sm:$0xf]
        %v689 = vld [vmem:[%s609 + $0x48] sm:$0xf]
        %v690 = vld [vmem:[%s609 + $0x4c] sm:$0xf]
        %v691 = vld [vmem:[%s609 + $0x50] sm:$0xf]
        %v692 = vld [vmem:[%s609 + $0x54] sm:$0xf]
        %v693 = vld [vmem:[%s609 + $0x58] sm:$0xf]
        %v694 = vld [vmem:[%s609 + $0x5c] sm:$0xf]
        %v695 = vld [vmem:[%s609 + $0x60] sm:$0xf]
        %v696 = vld [vmem:[%s609 + $0x64] sm:$0xf]
        %v697 = vld [vmem:[%s609 + $0x68] sm:$0xf]
        %v698 = vld [vmem:[%s609 + $0x6c] sm:$0xf]
        %v699 = vld [vmem:[%s609 + $0x70] sm:$0xf]
        %v700 = vld [vmem:[%s609 + $0x74] sm:$0xf]
        %v701 = vld [vmem:[%s609 + $0x78] sm:$0xf]
        %v702 = vld [vmem:[%s609 + $0x7c] sm:$0xf]
        %v711 = vunpack.c.l.b16 %v671
        %v712 = vunpack.c.l.b16 %v672
        %v713 = vunpack.c.l.b16 %v673
        %v714 = vunpack.c.l.b16 %v674
        %v715 = vunpack.c.l.b16 %v675
        %v716 = vunpack.c.l.b16 %v676
        %v717 = vunpack.c.l.b16 %v677
        %v718 = vunpack.c.l.b16 %v678
        %v719 = vpack.c.b16 %v712, %v711
        %v720 = vpack.c.b16 %v714, %v713
        %v721 = vpack.c.b16 %v716, %v715
        %v722 = vpack.c.b16 %v718, %v717
        %v728 = vsel %vm654, %v670, 0
        %730 = vmatprep.subr.bf16.mxu0 0
        %731 = vmatpush1.bf16.msra.mxu0 %v719
        %732 = vmatprep.subr.bf16.mxu0 0
        %733 = vmatpush1.bf16.msra.mxu0 %v720
        %734 = vmatprep.subr.bf16.mxu0 0
        %735 = vmatpush1.bf16.msra.mxu0 %v721
        %736 = vmatprep.subr.bf16.mxu0 0
        %737 = vmatpush1.bf16.msra.mxu0 %v722
        %738 = vmatprep.subr.bf16.mxu0 0
        %739 = vmatpush1.bf16.msra.mxu0 0
        %740 = vmatprep.subr.bf16.mxu0 0
        %741 = vmatpush1.bf16.msra.mxu0 0
        %742 = vmatprep.subr.bf16.mxu0 0
        %743 = vmatpush1.bf16.msra.mxu0 0
        %744 = vmatprep.subr.bf16.mxu0 0
        %745 = vmatpush1.bf16.msra.mxu0 0
        %746 = vmatprep.subr.bf16.mxu0 0
        %747 = vmatpush1.bf16.msra.mxu0 0
        %748 = vmatprep.subr.bf16.mxu0 0
        %749 = vmatpush1.bf16.msra.mxu0 0
        %750 = vmatprep.subr.bf16.mxu0 0
        %751 = vmatpush1.bf16.msra.mxu0 0
        %752 = vmatprep.subr.bf16.mxu0 0
        %753 = vmatpush1.bf16.msra.mxu0 0
        %754 = vmatprep.subr.bf16.mxu0 0
        %755 = vmatpush1.bf16.msra.mxu0 0
        %756 = vmatprep.subr.bf16.mxu0 0
        %757 = vmatpush1.bf16.msra.mxu0 0
        %758 = vmatprep.subr.bf16.mxu0 0
        %759 = vmatpush1.bf16.msra.mxu0 0
        %760 = vmatprep.subr.bf16.mxu0 0
        %761 = vmatpush1.bf16.msra.mxu0 0
        %762 = vmatprep.mubr.bf16.mxu0 0
        %763 = vmatmul.mubr.bf16.gmra.mrb[0].mxu0 %v728
        %v764 = vpop.f32.mrb[0].mxu0
        %v765 = vadd.f32 0.0, %v764
        %v766 = vpop.f32.mrb[0].mxu0
        %v767 = vpop.f32.mrb[0].mxu0
        %v768 = vpop.f32.mrb[0].mxu0
        %769 = vdwg.mxu0
        %v778 = vunpack.c.l.b16 %v679
        %v779 = vunpack.c.l.b16 %v680
        %v780 = vunpack.c.l.b16 %v681
        %v781 = vunpack.c.l.b16 %v682
        %v782 = vunpack.c.l.b16 %v683
        %v783 = vunpack.c.l.b16 %v684
        %v784 = vunpack.c.l.b16 %v685
        %v785 = vunpack.c.l.b16 %v686
        %v786 = vpack.c.b16 %v779, %v778
        %v787 = vpack.c.b16 %v781, %v780
        %v788 = vpack.c.b16 %v783, %v782
        %v789 = vpack.c.b16 %v785, %v784
        %794 = vmatprep.subr.bf16.mxu0 0
        %795 = vmatpush1.bf16.msra.mxu0 %v786
        %796 = vmatprep.subr.bf16.mxu0 0
        %797 = vmatpush1.bf16.msra.mxu0 %v787
        %798 = vmatprep.subr.bf16.mxu0 0
        %799 = vmatpush1.bf16.msra.mxu0 %v788
        %800 = vmatprep.subr.bf16.mxu0 0
        %801 = vmatpush1.bf16.msra.mxu0 %v789
        %802 = vmatprep.subr.bf16.mxu0 0
        %803 = vmatpush1.bf16.msra.mxu0 0
        %804 = vmatprep.subr.bf16.mxu0 0
        %805 = vmatpush1.bf16.msra.mxu0 0
        %806 = vmatprep.subr.bf16.mxu0 0
        %807 = vmatpush1.bf16.msra.mxu0 0
        %808 = vmatprep.subr.bf16.mxu0 0
        %809 = vmatpush1.bf16.msra.mxu0 0
        %810 = vmatprep.subr.bf16.mxu0 0
        %811 = vmatpush1.bf16.msra.mxu0 0
        %812 = vmatprep.subr.bf16.mxu0 0
        %813 = vmatpush1.bf16.msra.mxu0 0
        %814 = vmatprep.subr.bf16.mxu0 0
        %815 = vmatpush1.bf16.msra.mxu0 0
        %816 = vmatprep.subr.bf16.mxu0 0
        %817 = vmatpush1.bf16.msra.mxu0 0
        %818 = vmatprep.subr.bf16.mxu0 0
        %819 = vmatpush1.bf16.msra.mxu0 0
        %820 = vmatprep.subr.bf16.mxu0 0
        %821 = vmatpush1.bf16.msra.mxu0 0
        %822 = vmatprep.subr.bf16.mxu0 0
        %823 = vmatpush1.bf16.msra.mxu0 0
        %824 = vmatprep.subr.bf16.mxu0 0
        %825 = vmatpush1.bf16.msra.mxu0 0
        %826 = vmatprep.mubr.bf16.mxu0 0
        %827 = vmatmul.mubr.bf16.gmra.mrb[0].mxu0 %v728
        %v828 = vpop.f32.mrb[0].mxu0
        %v829 = vadd.f32 0.0, %v828
        %v830 = vpop.f32.mrb[0].mxu0
        %v831 = vpop.f32.mrb[0].mxu0
        %v832 = vpop.f32.mrb[0].mxu0
        %833 = vdwg.mxu0
        %v842 = vunpack.c.l.b16 %v687
        %v843 = vunpack.c.l.b16 %v688
        %v844 = vunpack.c.l.b16 %v689
        %v845 = vunpack.c.l.b16 %v690
        %v846 = vunpack.c.l.b16 %v691
        %v847 = vunpack.c.l.b16 %v692
        %v848 = vunpack.c.l.b16 %v693
        %v849 = vunpack.c.l.b16 %v694
        %v850 = vpack.c.b16 %v843, %v842
        %v851 = vpack.c.b16 %v845, %v844
        %v852 = vpack.c.b16 %v847, %v846
        %v853 = vpack.c.b16 %v849, %v848
        %858 = vmatprep.subr.bf16.mxu0 0
        %859 = vmatpush1.bf16.msra.mxu0 %v850
        %860 = vmatprep.subr.bf16.mxu0 0
        %861 = vmatpush1.bf16.msra.mxu0 %v851
        %862 = vmatprep.subr.bf16.mxu0 0
        %863 = vmatpush1.bf16.msra.mxu0 %v852
        %864 = vmatprep.subr.bf16.mxu0 0
        %865 = vmatpush1.bf16.msra.mxu0 %v853
        %866 = vmatprep.subr.bf16.mxu0 0
        %867 = vmatpush1.bf16.msra.mxu0 0
        %868 = vmatprep.subr.bf16.mxu0 0
        %869 = vmatpush1.bf16.msra.mxu0 0
        %870 = vmatprep.subr.bf16.mxu0 0
        %871 = vmatpush1.bf16.msra.mxu0 0
        %872 = vmatprep.subr.bf16.mxu0 0
        %873 = vmatpush1.bf16.msra.mxu0 0
        %874 = vmatprep.subr.bf16.mxu0 0
        %875 = vmatpush1.bf16.msra.mxu0 0
        %876 = vmatprep.subr.bf16.mxu0 0
        %877 = vmatpush1.bf16.msra.mxu0 0
        %878 = vmatprep.subr.bf16.mxu0 0
        %879 = vmatpush1.bf16.msra.mxu0 0
        %880 = vmatprep.subr.bf16.mxu0 0
        %881 = vmatpush1.bf16.msra.mxu0 0
        %882 = vmatprep.subr.bf16.mxu0 0
        %883 = vmatpush1.bf16.msra.mxu0 0
        %884 = vmatprep.subr.bf16.mxu0 0
        %885 = vmatpush1.bf16.msra.mxu0 0
        %886 = vmatprep.subr.bf16.mxu0 0
        %887 = vmatpush1.bf16.msra.mxu0 0
        %888 = vmatprep.subr.bf16.mxu0 0
        %889 = vmatpush1.bf16.msra.mxu0 0
        %890 = vmatprep.mubr.bf16.mxu0 0
        %891 = vmatmul.mubr.bf16.gmra.mrb[0].mxu0 %v728
        %v892 = vpop.f32.mrb[0].mxu0
        %v893 = vadd.f32 0.0, %v892
        %v894 = vpop.f32.mrb[0].mxu0
        %v895 = vpop.f32.mrb[0].mxu0
        %v896 = vpop.f32.mrb[0].mxu0
        %897 = vdwg.mxu0
        %v906 = vunpack.c.l.b16 %v695
        %v907 = vunpack.c.l.b16 %v696
        %v908 = vunpack.c.l.b16 %v697
        %v909 = vunpack.c.l.b16 %v698
        %v910 = vunpack.c.l.b16 %v699
        %v911 = vunpack.c.l.b16 %v700
        %v912 = vunpack.c.l.b16 %v701
        %v913 = vunpack.c.l.b16 %v702
        %v914 = vpack.c.b16 %v907, %v906
        %v915 = vpack.c.b16 %v909, %v908
        %v916 = vpack.c.b16 %v911, %v910
        %v917 = vpack.c.b16 %v913, %v912
        %922 = vmatprep.subr.bf16.mxu0 0
        %923 = vmatpush1.bf16.msra.mxu0 %v914
        %924 = vmatprep.subr.bf16.mxu0 0
        %925 = vmatpush1.bf16.msra.mxu0 %v915
        %926 = vmatprep.subr.bf16.mxu0 0
        %927 = vmatpush1.bf16.msra.mxu0 %v916
        %928 = vmatprep.subr.bf16.mxu0 0
        %929 = vmatpush1.bf16.msra.mxu0 %v917
        %930 = vmatprep.subr.bf16.mxu0 0
        %931 = vmatpush1.bf16.msra.mxu0 0
        %932 = vmatprep.subr.bf16.mxu0 0
        %933 = vmatpush1.bf16.msra.mxu0 0
        %934 = vmatprep.subr.bf16.mxu0 0
        %935 = vmatpush1.bf16.msra.mxu0 0
        %936 = vmatprep.subr.bf16.mxu0 0
        %937 = vmatpush1.bf16.msra.mxu0 0
        %938 = vmatprep.subr.bf16.mxu0 0
        %939 = vmatpush1.bf16.msra.mxu0 0
        %940 = vmatprep.subr.bf16.mxu0 0
        %941 = vmatpush1.bf16.msra.mxu0 0
        %942 = vmatprep.subr.bf16.mxu0 0
        %943 = vmatpush1.bf16.msra.mxu0 0
        %944 = vmatprep.subr.bf16.mxu0 0
        %945 = vmatpush1.bf16.msra.mxu0 0
        %946 = vmatprep.subr.bf16.mxu0 0
        %947 = vmatpush1.bf16.msra.mxu0 0
        %948 = vmatprep.subr.bf16.mxu0 0
        %949 = vmatpush1.bf16.msra.mxu0 0
        %950 = vmatprep.subr.bf16.mxu0 0
        %951 = vmatpush1.bf16.msra.mxu0 0
        %952 = vmatprep.subr.bf16.mxu0 0
        %953 = vmatpush1.bf16.msra.mxu0 0
        %954 = vmatprep.mubr.bf16.mxu0 0
        %955 = vmatmul.mubr.bf16.gmra.mrb[0].mxu0 %v728
        %v956 = vpop.f32.mrb[0].mxu0
        %v957 = vadd.f32 0.0, %v956
        %v958 = vpop.f32.mrb[0].mxu0
        %v959 = vpop.f32.mrb[0].mxu0
        %v960 = vpop.f32.mrb[0].mxu0
        %961 = vdwg.mxu0
        %v962 = vld [vmem:[%s614] sm:$0xf]
        %v963 = vld [vmem:[%s614 + $0x4] sm:$0xf]
        %v964 = vld [vmem:[%s614 + $0x8] sm:$0xf]
        %v965 = vld [vmem:[%s614 + $0xc] sm:$0xf]
        %v966 = vld [vmem:[%s614 + $0x10] sm:$0xf]
        %v967 = vld [vmem:[%s614 + $0x14] sm:$0xf]
        %v968 = vld [vmem:[%s614 + $0x18] sm:$0xf]
        %v969 = vld [vmem:[%s614 + $0x1c] sm:$0xf]
        %v970 = vld [vmem:[%s614 + $0x20] sm:$0xf]
        %v971 = vld [vmem:[%s614 + $0x24] sm:$0xf]
        %v972 = vld [vmem:[%s614 + $0x28] sm:$0xf]
        %v973 = vld [vmem:[%s614 + $0x2c] sm:$0xf]
        %v974 = vld [vmem:[%s614 + $0x30] sm:$0xf]
        %v975 = vld [vmem:[%s614 + $0x34] sm:$0xf]
        %v976 = vld [vmem:[%s614 + $0x38] sm:$0xf]
        %v977 = vld [vmem:[%s614 + $0x3c] sm:$0xf]
        %v986 = vunpack.c.l.b16 %v962
        %v987 = vunpack.c.l.b16 %v963
        %v988 = vunpack.c.l.b16 %v964
        %v989 = vunpack.c.l.b16 %v965
        %v990 = vunpack.c.l.b16 %v966
        %v991 = vunpack.c.l.b16 %v967
        %v992 = vunpack.c.l.b16 %v968
        %v993 = vunpack.c.l.b16 %v969
        %v994 = vpack.c.b16 %v987, %v986
        %v995 = vpack.c.b16 %v989, %v988
        %v996 = vpack.c.b16 %v991, %v990
        %v997 = vpack.c.b16 %v993, %v992
        %1002 = vmatprep.subr.bf16.mxu0 0
        %1003 = vmatpush1.bf16.msra.mxu0 %v994
        %1004 = vmatprep.subr.bf16.mxu0 0
        %1005 = vmatpush1.bf16.msra.mxu0 %v995
        %1006 = vmatprep.subr.bf16.mxu0 0
        %1007 = vmatpush1.bf16.msra.mxu0 %v996
        %1008 = vmatprep.subr.bf16.mxu0 0
        %1009 = vmatpush1.bf16.msra.mxu0 %v997
        %1010 = vmatprep.subr.bf16.mxu0 0
        %1011 = vmatpush1.bf16.msra.mxu0 0
        %1012 = vmatprep.subr.bf16.mxu0 0
        %1013 = vmatpush1.bf16.msra.mxu0 0
        %1014 = vmatprep.subr.bf16.mxu0 0
        %1015 = vmatpush1.bf16.msra.mxu0 0
        %1016 = vmatprep.subr.bf16.mxu0 0
        %1017 = vmatpush1.bf16.msra.mxu0 0
        %1018 = vmatprep.subr.bf16.mxu0 0
        %1019 = vmatpush1.bf16.msra.mxu0 0
        %1020 = vmatprep.subr.bf16.mxu0 0
        %1021 = vmatpush1.bf16.msra.mxu0 0
        %1022 = vmatprep.subr.bf16.mxu0 0
        %1023 = vmatpush1.bf16.msra.mxu0 0
        %1024 = vmatprep.subr.bf16.mxu0 0
        %1025 = vmatpush1.bf16.msra.mxu0 0
        %1026 = vmatprep.subr.bf16.mxu0 0
        %1027 = vmatpush1.bf16.msra.mxu0 0
        %1028 = vmatprep.subr.bf16.mxu0 0
        %1029 = vmatpush1.bf16.msra.mxu0 0
        %1030 = vmatprep.subr.bf16.mxu0 0
        %1031 = vmatpush1.bf16.msra.mxu0 0
        %1032 = vmatprep.subr.bf16.mxu0 0
        %1033 = vmatpush1.bf16.msra.mxu0 0
        %1034 = vmatprep.mubr.bf16.mxu0 0
        %1035 = vmatmul.mubr.bf16.gmra.mrb[0].mxu0 %v728
        %v1036 = vpop.f32.mrb[0].mxu0
        %v1037 = vadd.f32 0.0, %v1036
        %v1038 = vpop.f32.mrb[0].mxu0
        %v1039 = vpop.f32.mrb[0].mxu0
        %v1040 = vpop.f32.mrb[0].mxu0
        %1041 = vdwg.mxu0
        %v1050 = vunpack.c.l.b16 %v970
        %v1051 = vunpack.c.l.b16 %v971
        %v1052 = vunpack.c.l.b16 %v972
        %v1053 = vunpack.c.l.b16 %v973
        %v1054 = vunpack.c.l.b16 %v974
        %v1055 = vunpack.c.l.b16 %v975
        %v1056 = vunpack.c.l.b16 %v976
        %v1057 = vunpack.c.l.b16 %v977
        %v1058 = vpack.c.b16 %v1051, %v1050
        %v1059 = vpack.c.b16 %v1053, %v1052
        %v1060 = vpack.c.b16 %v1055, %v1054
        %v1061 = vpack.c.b16 %v1057, %v1056
        %1066 = vmatprep.subr.bf16.mxu0 0
        %1067 = vmatpush1.bf16.msra.mxu0 %v1058
        %1068 = vmatprep.subr.bf16.mxu0 0
        %1069 = vmatpush1.bf16.msra.mxu0 %v1059
        %1070 = vmatprep.subr.bf16.mxu0 0
        %1071 = vmatpush1.bf16.msra.mxu0 %v1060
        %1072 = vmatprep.subr.bf16.mxu0 0
        %1073 = vmatpush1.bf16.msra.mxu0 %v1061
        %1074 = vmatprep.subr.bf16.mxu0 0
        %1075 = vmatpush1.bf16.msra.mxu0 0
        %1076 = vmatprep.subr.bf16.mxu0 0
        %1077 = vmatpush1.bf16.msra.mxu0 0
        %1078 = vmatprep.subr.bf16.mxu0 0
        %1079 = vmatpush1.bf16.msra.mxu0 0
        %1080 = vmatprep.subr.bf16.mxu0 0
        %1081 = vmatpush1.bf16.msra.mxu0 0
        %1082 = vmatprep.subr.bf16.mxu0 0
        %1083 = vmatpush1.bf16.msra.mxu0 0
        %1084 = vmatprep.subr.bf16.mxu0 0
        %1085 = vmatpush1.bf16.msra.mxu0 0
        %1086 = vmatprep.subr.bf16.mxu0 0
        %1087 = vmatpush1.bf16.msra.mxu0 0
        %1088 = vmatprep.subr.bf16.mxu0 0
        %1089 = vmatpush1.bf16.msra.mxu0 0
        %1090 = vmatprep.subr.bf16.mxu0 0
        %1091 = vmatpush1.bf16.msra.mxu0 0
        %1092 = vmatprep.subr.bf16.mxu0 0
        %1093 = vmatpush1.bf16.msra.mxu0 0
        %1094 = vmatprep.subr.bf16.mxu0 0
        %1095 = vmatpush1.bf16.msra.mxu0 0
        %1096 = vmatprep.subr.bf16.mxu0 0
        %1097 = vmatpush1.bf16.msra.mxu0 0
        %1098 = vmatprep.mubr.bf16.mxu0 0
        %1099 = vmatmul.mubr.bf16.gmra.mrb[0].mxu0 %v728
        %v1100 = vpop.f32.mrb[0].mxu0
        %v1101 = vadd.f32 0.0, %v1100
        %v1102 = vpop.f32.mrb[0].mxu0
        %v1103 = vpop.f32.mrb[0].mxu0
        %v1104 = vpop.f32.mrb[0].mxu0
        %1105 = vdwg.mxu0
        %v1106 = vld [vmem:[%s619] sm:$0xf]
        %v1107 = vld [vmem:[%s619 + $0x4] sm:$0xf]
        %v1108 = vld [vmem:[%s619 + $0x8] sm:$0xf]
        %v1109 = vld [vmem:[%s619 + $0xc] sm:$0xf]
        %v1110 = vld [vmem:[%s619 + $0x10] sm:$0xf]
        %v1111 = vld [vmem:[%s619 + $0x14] sm:$0xf]
        %v1112 = vld [vmem:[%s619 + $0x18] sm:$0xf]
        %v1113 = vld [vmem:[%s619 + $0x1c] sm:$0xf]
        %v1114 = vld [vmem:[%s619 + $0x20] sm:$0xf]
        %v1115 = vld [vmem:[%s619 + $0x24] sm:$0xf]
        %v1116 = vld [vmem:[%s619 + $0x28] sm:$0xf]
        %v1117 = vld [vmem:[%s619 + $0x2c] sm:$0xf]
        %v1118 = vld [vmem:[%s619 + $0x30] sm:$0xf]
        %v1119 = vld [vmem:[%s619 + $0x34] sm:$0xf]
        %v1120 = vld [vmem:[%s619 + $0x38] sm:$0xf]
        %v1121 = vld [vmem:[%s619 + $0x3c] sm:$0xf]
        %v1130 = vunpack.c.l.b16 %v1106
        %v1131 = vunpack.c.l.b16 %v1107
        %v1132 = vunpack.c.l.b16 %v1108
        %v1133 = vunpack.c.l.b16 %v1109
        %v1134 = vunpack.c.l.b16 %v1110
        %v1135 = vunpack.c.l.b16 %v1111
        %v1136 = vunpack.c.l.b16 %v1112
        %v1137 = vunpack.c.l.b16 %v1113
        %v1138 = vpack.c.b16 %v1131, %v1130
        %v1139 = vpack.c.b16 %v1133, %v1132
        %v1140 = vpack.c.b16 %v1135, %v1134
        %v1141 = vpack.c.b16 %v1137, %v1136
        %1146 = vmatprep.subr.bf16.mxu0 0
        %1147 = vmatpush1.bf16.msra.mxu0 %v1138
        %1148 = vmatprep.subr.bf16.mxu0 0
        %1149 = vmatpush1.bf16.msra.mxu0 %v1139
        %1150 = vmatprep.subr.bf16.mxu0 0
        %1151 = vmatpush1.bf16.msra.mxu0 %v1140
        %1152 = vmatprep.subr.bf16.mxu0 0
        %1153 = vmatpush1.bf16.msra.mxu0 %v1141
        %1154 = vmatprep.subr.bf16.mxu0 0
        %1155 = vmatpush1.bf16.msra.mxu0 0
        %1156 = vmatprep.subr.bf16.mxu0 0
        %1157 = vmatpush1.bf16.msra.mxu0 0
        %1158 = vmatprep.subr.bf16.mxu0 0
        %1159 = vmatpush1.bf16.msra.mxu0 0
        %1160 = vmatprep.subr.bf16.mxu0 0
        %1161 = vmatpush1.bf16.msra.mxu0 0
        %1162 = vmatprep.subr.bf16.mxu0 0
        %1163 = vmatpush1.bf16.msra.mxu0 0
        %1164 = vmatprep.subr.bf16.mxu0 0
        %1165 = vmatpush1.bf16.msra.mxu0 0
        %1166 = vmatprep.subr.bf16.mxu0 0
        %1167 = vmatpush1.bf16.msra.mxu0 0
        %1168 = vmatprep.subr.bf16.mxu0 0
        %1169 = vmatpush1.bf16.msra.mxu0 0
        %1170 = vmatprep.subr.bf16.mxu0 0
        %1171 = vmatpush1.bf16.msra.mxu0 0
        %1172 = vmatprep.subr.bf16.mxu0 0
        %1173 = vmatpush1.bf16.msra.mxu0 0
        %1174 = vmatprep.subr.bf16.mxu0 0
        %1175 = vmatpush1.bf16.msra.mxu0 0
        %1176 = vmatprep.subr.bf16.mxu0 0
        %1177 = vmatpush1.bf16.msra.mxu0 0
        %1178 = vmatprep.mubr.bf16.mxu0 0
        %1179 = vmatmul.mubr.bf16.gmra.mrb[0].mxu0 %v728
        %v1180 = vpop.f32.mrb[0].mxu0
        %v1181 = vadd.f32 0.0, %v1180
        %v1182 = vpop.f32.mrb[0].mxu0
        %v1183 = vpop.f32.mrb[0].mxu0
        %v1184 = vpop.f32.mrb[0].mxu0
        %1185 = vdwg.mxu0
        %v1194 = vunpack.c.l.b16 %v1114
        %v1195 = vunpack.c.l.b16 %v1115
        %v1196 = vunpack.c.l.b16 %v1116
        %v1197 = vunpack.c.l.b16 %v1117
        %v1198 = vunpack.c.l.b16 %v1118
        %v1199 = vunpack.c.l.b16 %v1119
        %v1200 = vunpack.c.l.b16 %v1120
        %v1201 = vunpack.c.l.b16 %v1121
        %v1202 = vpack.c.b16 %v1195, %v1194
        %v1203 = vpack.c.b16 %v1197, %v1196
        %v1204 = vpack.c.b16 %v1199, %v1198
        %v1205 = vpack.c.b16 %v1201, %v1200
        %1210 = vmatprep.subr.bf16.mxu0 0
        %1211 = vmatpush1.bf16.msra.mxu0 %v1202
        %1212 = vmatprep.subr.bf16.mxu0 0
        %1213 = vmatpush1.bf16.msra.mxu0 %v1203
        %1214 = vmatprep.subr.bf16.mxu0 0
        %1215 = vmatpush1.bf16.msra.mxu0 %v1204
        %1216 = vmatprep.subr.bf16.mxu0 0
        %1217 = vmatpush1.bf16.msra.mxu0 %v1205
        %1218 = vmatprep.subr.bf16.mxu0 0
        %1219 = vmatpush1.bf16.msra.mxu0 0
        %1220 = vmatprep.subr.bf16.mxu0 0
        %1221 = vmatpush1.bf16.msra.mxu0 0
        %1222 = vmatprep.subr.bf16.mxu0 0
        %1223 = vmatpush1.bf16.msra.mxu0 0
        %1224 = vmatprep.subr.bf16.mxu0 0
        %1225 = vmatpush1.bf16.msra.mxu0 0
        %1226 = vmatprep.subr.bf16.mxu0 0
        %1227 = vmatpush1.bf16.msra.mxu0 0
        %1228 = vmatprep.subr.bf16.mxu0 0
        %1229 = vmatpush1.bf16.msra.mxu0 0
        %1230 = vmatprep.subr.bf16.mxu0 0
        %1231 = vmatpush1.bf16.msra.mxu0 0
        %1232 = vmatprep.subr.bf16.mxu0 0
        %1233 = vmatpush1.bf16.msra.mxu0 0
        %1234 = vmatprep.subr.bf16.mxu0 0
        %1235 = vmatpush1.bf16.msra.mxu0 0
        %1236 = vmatprep.subr.bf16.mxu0 0
        %1237 = vmatpush1.bf16.msra.mxu0 0
        %1238 = vmatprep.subr.bf16.mxu0 0
        %1239 = vmatpush1.bf16.msra.mxu0 0
        %1240 = vmatprep.subr.bf16.mxu0 0
        %1241 = vmatpush1.bf16.msra.mxu0 0
        %1242 = vmatprep.mubr.bf16.mxu0 0
        %1243 = vmatmul.mubr.bf16.gmra.mrb[0].mxu0 %v728
        %v1244 = vpop.f32.mrb[0].mxu0
        %v1245 = vadd.f32 0.0, %v1244
        %v1246 = vpop.f32.mrb[0].mxu0
        %v1247 = vpop.f32.mrb[0].mxu0
        %v1248 = vpop.f32.mrb[0].mxu0
        %1249 = vdwg.mxu0
        %v1250 = vld [vmem:[%s1] sm:$0xff]
        %v1251 = vld [vmem:[%s2] sm:$0xff]
        %v1252 = vmul.f32 %v765, %v1250
        %v1253 = vmul.f32 %v829, %v1250
        %v1254 = vmul.f32 %v893, %v1250
        %v1255 = vmul.f32 %v957, %v1250
        %1257 = vrot.lane.b32.xlu0 %v1251, 8
        %v1258 = vpop.permute.xlu0 %1257
        %v1260 = vmul.f32 %v765, %v1258
        %v1261 = vmul.f32 %v829, %v1258
        %v1262 = vmul.f32 %v893, %v1258
        %v1263 = vmul.f32 %v957, %v1258
        %1268 = vrot.lane.b32.xlu0 %v1260, 120
        %v1269 = vpop.permute.xlu0 %1268
        %1270 = vrot.lane.b32.xlu0 %v1261, 120
        %v1271 = vpop.permute.xlu0 %1270
        %1272 = vrot.lane.b32.xlu0 %v1262, 120
        %v1273 = vpop.permute.xlu0 %1272
        %1274 = vrot.lane.b32.xlu0 %v1263, 120
        %v1275 = vpop.permute.xlu0 %1274
        %v1280 = vsub.f32 %v1252, %v1269
        %v1281 = vsub.f32 %v1253, %v1271
        %v1282 = vsub.f32 %v1254, %v1273
        %v1283 = vsub.f32 %v1255, %v1275
        %v1284 = vmul.f32 %v765, %v1251
        %v1285 = vmul.f32 %v829, %v1251
        %v1286 = vmul.f32 %v893, %v1251
        %v1287 = vmul.f32 %v957, %v1251
        %1289 = vrot.lane.b32.xlu0 %v1250, 8
        %v1290 = vpop.permute.xlu0 %1289
        %v1292 = vmul.f32 %v765, %v1290
        %v1293 = vmul.f32 %v829, %v1290
        %v1294 = vmul.f32 %v893, %v1290
        %v1295 = vmul.f32 %v957, %v1290
        %1300 = vrot.lane.b32.xlu0 %v1292, 120
        %v1301 = vpop.permute.xlu0 %1300
        %1302 = vrot.lane.b32.xlu0 %v1293, 120
        %v1303 = vpop.permute.xlu0 %1302
        %1304 = vrot.lane.b32.xlu0 %v1294, 120
        %v1305 = vpop.permute.xlu0 %1304
        %1306 = vrot.lane.b32.xlu0 %v1295, 120
        %v1307 = vpop.permute.xlu0 %1306
        %v1312 = vadd.f32 %v1284, %v1301
        %v1313 = vadd.f32 %v1285, %v1303
        %v1314 = vadd.f32 %v1286, %v1305
        %v1315 = vadd.f32 %v1287, %v1307
        %1320 = vrot.lane.b32.xlu0 %v1312, 8
        %v1321 = vpop.permute.xlu0 %1320
        %1322 = vrot.lane.b32.xlu0 %v1313, 8
        %v1323 = vpop.permute.xlu0 %1322
        %1324 = vrot.lane.b32.xlu0 %v1314, 8
        %v1325 = vpop.permute.xlu0 %1324
        %1326 = vrot.lane.b32.xlu0 %v1315, 8
        %v1327 = vpop.permute.xlu0 %1326
        %vm1332 = vcmask 64512
        %v1333 = vsel %vm1332, %v1280, %v1321
        %v1334 = vsel %vm1332, %v1281, %v1323
        %v1335 = vsel %vm1332, %v1282, %v1325
        %v1336 = vsel %vm1332, %v1283, %v1327
        %v1337 = vmul.f32 %v1333, 0.25
        %v1338 = vmul.f32 %v1334, 0.25
        %v1339 = vmul.f32 %v1335, 0.25
        %v1340 = vmul.f32 %v1336, 0.25
        %v1341 = vmul.f32 %v1037, %v1250
        %v1342 = vmul.f32 %v1101, %v1250
        %v1343 = vmul.f32 %v1037, %v1258
        %v1344 = vmul.f32 %v1101, %v1258
        %1347 = vrot.lane.b32.xlu0 %v1343, 120
        %v1348 = vpop.permute.xlu0 %1347
        %1349 = vrot.lane.b32.xlu0 %v1344, 120
        %v1350 = vpop.permute.xlu0 %1349
        %v1353 = vsub.f32 %v1341, %v1348
        %v1354 = vsub.f32 %v1342, %v1350
        %v1355 = vmul.f32 %v1037, %v1251
        %v1356 = vmul.f32 %v1101, %v1251
        %v1357 = vmul.f32 %v1037, %v1290
        %v1358 = vmul.f32 %v1101, %v1290
        %1361 = vrot.lane.b32.xlu0 %v1357, 120
        %v1362 = vpop.permute.xlu0 %1361
        %1363 = vrot.lane.b32.xlu0 %v1358, 120
        %v1364 = vpop.permute.xlu0 %1363
        %v1367 = vadd.f32 %v1355, %v1362
        %v1368 = vadd.f32 %v1356, %v1364
        %1371 = vrot.lane.b32.xlu0 %v1367, 8
        %v1372 = vpop.permute.xlu0 %1371
        %1373 = vrot.lane.b32.xlu0 %v1368, 8
        %v1374 = vpop.permute.xlu0 %1373
        %v1377 = vsel %vm1332, %v1353, %v1372
        %v1378 = vsel %vm1332, %v1354, %v1374
        %v1379 = vpack.c.bf16 %v1337, %v1337
        %v1380 = vpack.c.bf16 %v1338, %v1338
        %v1381 = vpack.c.bf16 %v1339, %v1339
        %v1382 = vpack.c.bf16 %v1340, %v1340
        %v1383 = vpack.c.bf16 %v1377, %v1377
        %v1384 = vpack.c.bf16 %v1378, %v1378
        %vm1385 = vcmask 130048
        %v1387 = vsel %vm1385, %v1379, 0
        %v1390 = vsel %vm1385, %v1383, 0
        %1392 = vmatprep.subr.bf16.mxu0 0
        %1393 = vmatpush1.bf16.xpose.msra.mxu0 %v1390
        %1394 = vmatprep.subr.bf16.mxu0 0
        %1395 = vmatpush1.bf16.xpose.msra.mxu0 0
        %1396 = vmatprep.subr.bf16.mxu0 0
        %1397 = vmatpush1.bf16.xpose.msra.mxu0 0
        %1398 = vmatprep.subr.bf16.mxu0 0
        %1399 = vmatpush1.bf16.xpose.msra.mxu0 0
        %1400 = vmatprep.subr.bf16.mxu0 0
        %1401 = vmatpush1.bf16.xpose.msra.mxu0 0
        %1402 = vmatprep.subr.bf16.mxu0 0
        %1403 = vmatpush1.bf16.xpose.msra.mxu0 0
        %1404 = vmatprep.subr.bf16.mxu0 0
        %1405 = vmatpush1.bf16.xpose.msra.mxu0 0
        %1406 = vmatprep.subr.bf16.mxu0 0
        %1407 = vmatpush1.bf16.xpose.msra.mxu0 0
        %1408 = vmatprep.subr.bf16.mxu0 0
        %1409 = vmatpush1.bf16.xpose.msra.mxu0 0
        %1410 = vmatprep.subr.bf16.mxu0 0
        %1411 = vmatpush1.bf16.xpose.msra.mxu0 0
        %1412 = vmatprep.subr.bf16.mxu0 0
        %1413 = vmatpush1.bf16.xpose.msra.mxu0 0
        %1414 = vmatprep.subr.bf16.mxu0 0
        %1415 = vmatpush1.bf16.xpose.msra.mxu0 0
        %1416 = vmatprep.subr.bf16.mxu0 0
        %1417 = vmatpush1.bf16.xpose.msra.mxu0 0
        %1418 = vmatprep.subr.bf16.mxu0 0
        %1419 = vmatpush1.bf16.xpose.msra.mxu0 0
        %1420 = vmatprep.subr.bf16.mxu0 0
        %1421 = vmatpush1.bf16.xpose.msra.mxu0 0
        %1422 = vmatprep.subr.bf16.mxu0 0
        %1423 = vmatpush1.bf16.xpose.msra.mxu0 0
        %1424 = vmatprep.mubr.bf16.mxu0 0
        %1425 = vmatmul.mubr.bf16.gmra.mrb[0].mxu0 %v1387
        %v1426 = vpop.f32.mrb[0].mxu0
        %v1427 = vadd.f32 0.0, %v1426
        %v1428 = vpop.f32.mrb[0].mxu0
        %v1429 = vpop.f32.mrb[0].mxu0
        %v1430 = vpop.f32.mrb[0].mxu0
        %1431 = vdwg.mxu0
        %v1433 = vsel %vm1385, %v1380, 0
        %1435 = vmatprep.subr.bf16.mxu0 0
        %1436 = vmatpush1.bf16.xpose.msra.mxu0 %v1390
        %1437 = vmatprep.subr.bf16.mxu0 0
        %1438 = vmatpush1.bf16.xpose.msra.mxu0 0
        %1439 = vmatprep.subr.bf16.mxu0 0
        %1440 = vmatpush1.bf16.xpose.msra.mxu0 0
        %1441 = vmatprep.subr.bf16.mxu0 0
        %1442 = vmatpush1.bf16.xpose.msra.mxu0 0
        %1443 = vmatprep.subr.bf16.mxu0 0
        %1444 = vmatpush1.bf16.xpose.msra.mxu0 0
        %1445 = vmatprep.subr.bf16.mxu0 0
        %1446 = vmatpush1.bf16.xpose.msra.mxu0 0
        %1447 = vmatprep.subr.bf16.mxu0 0
        %1448 = vmatpush1.bf16.xpose.msra.mxu0 0
        %1449 = vmatprep.subr.bf16.mxu0 0
        %1450 = vmatpush1.bf16.xpose.msra.mxu0 0
        %1451 = vmatprep.subr.bf16.mxu0 0
        %1452 = vmatpush1.bf16.xpose.msra.mxu0 0
        %1453 = vmatprep.subr.bf16.mxu0 0
        %1454 = vmatpush1.bf16.xpose.msra.mxu0 0
        %1455 = vmatprep.subr.bf16.mxu0 0
        %1456 = vmatpush1.bf16.xpose.msra.mxu0 0
        %1457 = vmatprep.subr.bf16.mxu0 0
        %1458 = vmatpush1.bf16.xpose.msra.mxu0 0
        %1459 = vmatprep.subr.bf16.mxu0 0
        %1460 = vmatpush1.bf16.xpose.msra.mxu0 0
        %1461 = vmatprep.subr.bf16.mxu0 0
        %1462 = vmatpush1.bf16.xpose.msra.mxu0 0
        %1463 = vmatprep.subr.bf16.mxu0 0
        %1464 = vmatpush1.bf16.xpose.msra.mxu0 0
        %1465 = vmatprep.subr.bf16.mxu0 0
        %1466 = vmatpush1.bf16.xpose.msra.mxu0 0
        %1467 = vmatprep.mubr.bf16.mxu0 0
        %1468 = vmatmul.mubr.bf16.gmra.mrb[0].mxu0 %v1433
        %v1469 = vpop.f32.mrb[0].mxu0
        %v1470 = vadd.f32 0.0, %v1469
        %v1471 = vpop.f32.mrb[0].mxu0
        %v1472 = vpop.f32.mrb[0].mxu0
        %v1473 = vpop.f32.mrb[0].mxu0
        %1474 = vdwg.mxu0
        %v1476 = vsel %vm1385, %v1381, 0
        %v1479 = vsel %vm1385, %v1384, 0
        %1481 = vmatprep.subr.bf16.mxu0 0
        %1482 = vmatpush1.bf16.xpose.msra.mxu0 %v1479
        %1483 = vmatprep.subr.bf16.mxu0 0
        %1484 = vmatpush1.bf16.xpose.msra.mxu0 0
        %1485 = vmatprep.subr.bf16.mxu0 0
        %1486 = vmatpush1.bf16.xpose.msra.mxu0 0
        %1487 = vmatprep.subr.bf16.mxu0 0
        %1488 = vmatpush1.bf16.xpose.msra.mxu0 0
        %1489 = vmatprep.subr.bf16.mxu0 0
        %1490 = vmatpush1.bf16.xpose.msra.mxu0 0
        %1491 = vmatprep.subr.bf16.mxu0 0
        %1492 = vmatpush1.bf16.xpose.msra.mxu0 0
        %1493 = vmatprep.subr.bf16.mxu0 0
        %1494 = vmatpush1.bf16.xpose.msra.mxu0 0
        %1495 = vmatprep.subr.bf16.mxu0 0
        %1496 = vmatpush1.bf16.xpose.msra.mxu0 0
        %1497 = vmatprep.subr.bf16.mxu0 0
        %1498 = vmatpush1.bf16.xpose.msra.mxu0 0
        %1499 = vmatprep.subr.bf16.mxu0 0
        %1500 = vmatpush1.bf16.xpose.msra.mxu0 0
        %1501 = vmatprep.subr.bf16.mxu0 0
        %1502 = vmatpush1.bf16.xpose.msra.mxu0 0
        %1503 = vmatprep.subr.bf16.mxu0 0
        %1504 = vmatpush1.bf16.xpose.msra.mxu0 0
        %1505 = vmatprep.subr.bf16.mxu0 0
        %1506 = vmatpush1.bf16.xpose.msra.mxu0 0
        %1507 = vmatprep.subr.bf16.mxu0 0
        %1508 = vmatpush1.bf16.xpose.msra.mxu0 0
        %1509 = vmatprep.subr.bf16.mxu0 0
        %1510 = vmatpush1.bf16.xpose.msra.mxu0 0
        %1511 = vmatprep.subr.bf16.mxu0 0
        %1512 = vmatpush1.bf16.xpose.msra.mxu0 0
        %1513 = vmatprep.mubr.bf16.mxu0 0
        %1514 = vmatmul.mubr.bf16.gmra.mrb[0].mxu0 %v1476
        %v1515 = vpop.f32.mrb[0].mxu0
        %v1516 = vadd.f32 0.0, %v1515
        %v1517 = vpop.f32.mrb[0].mxu0
        %v1518 = vpop.f32.mrb[0].mxu0
        %v1519 = vpop.f32.mrb[0].mxu0
        %1520 = vdwg.mxu0
        %v1522 = vsel %vm1385, %v1382, 0
        %1524 = vmatprep.subr.bf16.mxu0 0
        %1525 = vmatpush1.bf16.xpose.msra.mxu0 %v1479
        %1526 = vmatprep.subr.bf16.mxu0 0
        %1527 = vmatpush1.bf16.xpose.msra.mxu0 0
        %1528 = vmatprep.subr.bf16.mxu0 0
        %1529 = vmatpush1.bf16.xpose.msra.mxu0 0
        %1530 = vmatprep.subr.bf16.mxu0 0
        %1531 = vmatpush1.bf16.xpose.msra.mxu0 0
        %1532 = vmatprep.subr.bf16.mxu0 0
        %1533 = vmatpush1.bf16.xpose.msra.mxu0 0
        %1534 = vmatprep.subr.bf16.mxu0 0
        %1535 = vmatpush1.bf16.xpose.msra.mxu0 0
        %1536 = vmatprep.subr.bf16.mxu0 0
        %1537 = vmatpush1.bf16.xpose.msra.mxu0 0
        %1538 = vmatprep.subr.bf16.mxu0 0
        %1539 = vmatpush1.bf16.xpose.msra.mxu0 0
        %1540 = vmatprep.subr.bf16.mxu0 0
        %1541 = vmatpush1.bf16.xpose.msra.mxu0 0
        %1542 = vmatprep.subr.bf16.mxu0 0
        %1543 = vmatpush1.bf16.xpose.msra.mxu0 0
        %1544 = vmatprep.subr.bf16.mxu0 0
        %1545 = vmatpush1.bf16.xpose.msra.mxu0 0
        %1546 = vmatprep.subr.bf16.mxu0 0
        %1547 = vmatpush1.bf16.xpose.msra.mxu0 0
        %1548 = vmatprep.subr.bf16.mxu0 0
        %1549 = vmatpush1.bf16.xpose.msra.mxu0 0
        %1550 = vmatprep.subr.bf16.mxu0 0
        %1551 = vmatpush1.bf16.xpose.msra.mxu0 0
        %1552 = vmatprep.subr.bf16.mxu0 0
        %1553 = vmatpush1.bf16.xpose.msra.mxu0 0
        %1554 = vmatprep.subr.bf16.mxu0 0
        %1555 = vmatpush1.bf16.xpose.msra.mxu0 0
        %1556 = vmatprep.mubr.bf16.mxu0 0
        %1557 = vmatmul.mubr.bf16.gmra.mrb[0].mxu0 %v1522
        %v1558 = vpop.f32.mrb[0].mxu0
        %v1559 = vadd.f32 0.0, %v1558
        %v1560 = vpop.f32.mrb[0].mxu0
        %v1561 = vpop.f32.mrb[0].mxu0
        %v1562 = vpop.f32.mrb[0].mxu0
        %1563 = vdwg.mxu0
        %v1564 = vlaneseq
        %v1565 = vshrl.u32 %v1564, 7
        %v1566 = vlaneseq
        %v1567 = vand.u32 %v1566, 127
        %vm1568 = vcmp.le.s32.totalorder %v1567, %v1565
        %v1569 = vsel %vm1568, 1, 0
        %vm1570 = vcmp.eq.s32.totalorder %v1569, 1
        %v1571 = vsel %vm1570, %v1427, -inf
        %v1572 = vsel %vm1570, %v1470, -inf
        %v1573 = vsel %vm1570, %v1516, -inf
        %v1574 = vsel %vm1570, %v1559, -inf
        %v1575 = vsel %vm1332, %v1571, -inf
        %1576 = vmax.xlane.f32.xlu0 %v1575
        %v1577 = vpop.xlane.xlu0 %1576
        %v1578 = vsel %vm1332, %v1572, -inf
        %1579 = vmax.xlane.f32.xlu0 %v1578
        %v1580 = vpop.xlane.xlu0 %1579
        %v1581 = vsel %vm1332, %v1573, -inf
        %1582 = vmax.xlane.f32.xlu0 %v1581
        %v1583 = vpop.xlane.xlu0 %1582
        %v1584 = vsel %vm1332, %v1574, -inf
        %1585 = vmax.xlane.f32.xlu0 %v1584
        %v1586 = vpop.xlane.xlu0 %1585
        %v1587 = vsub.f32 %v1571, %v1577
        %v1588 = vsub.f32 %v1572, %v1580
        %v1589 = vsub.f32 %v1573, %v1583
        %v1590 = vsub.f32 %v1574, %v1586
        %v1591 = vmul.f32 %v1587, 1.442695
        %v1592 = vpow.pop %v1591
        %v1593 = vmul.f32 %v1588, 1.442695
        %v1594 = vpow.pop %v1593
        %v1595 = vmul.f32 %v1589, 1.442695
        %v1596 = vpow.pop %v1595
        %v1597 = vmul.f32 %v1590, 1.442695
        %v1598 = vpow.pop %v1597
        %v1599 = vsel %vm1332, %v1592, 0.0
        %1600 = vadd.xlane.f32.xlu0 %v1599
        %v1601 = vpop.xlane.xlu0 %1600
        %v1602 = vsel %vm1332, %v1594, 0.0
        %1603 = vadd.xlane.f32.xlu0 %v1602
        %v1604 = vpop.xlane.xlu0 %1603
        %v1605 = vsel %vm1332, %v1596, 0.0
        %1606 = vadd.xlane.f32.xlu0 %v1605
        %v1607 = vpop.xlane.xlu0 %1606
        %v1608 = vsel %vm1332, %v1598, 0.0
        %1609 = vadd.xlane.f32.xlu0 %v1608
        %v1610 = vpop.xlane.xlu0 %1609
        %v1611 = vrcp.pop %v1601
        %v1612 = vrcp.pop %v1604
        %v1613 = vrcp.pop %v1607
        %v1614 = vrcp.pop %v1610
        %v1615 = vmul.f32 %v1592, %v1611
        %v1616 = vmul.f32 %v1594, %v1612
        %v1617 = vmul.f32 %v1596, %v1613
        %v1618 = vmul.f32 %v1598, %v1614
        %v1619 = vpack.c.bf16 %v1615, %v1615
        %v1620 = vpack.c.bf16 %v1616, %v1616
        %v1621 = vpack.c.bf16 %v1617, %v1617
        %v1622 = vpack.c.bf16 %v1618, %v1618
        %v1623 = vpack.c.bf16 %v1181, %v1181
        %v1624 = vpack.c.bf16 %v1245, %v1245
        %v1626 = vsel %vm1332, %v1619, 0
        %vm1628 = vcmask 1043456
        %v1630 = vsel %vm1628, %v1623, 0
        %1632 = vmatprep.subr.bf16.mxu0 0
        %1633 = vmatpush1.bf16.msra.mxu0 %v1630
        %1634 = vmatprep.subr.bf16.mxu0 0
        %1635 = vmatpush1.bf16.msra.mxu0 0
        %1636 = vmatprep.subr.bf16.mxu0 0
        %1637 = vmatpush1.bf16.msra.mxu0 0
        %1638 = vmatprep.subr.bf16.mxu0 0
        %1639 = vmatpush1.bf16.msra.mxu0 0
        %1640 = vmatprep.subr.bf16.mxu0 0
        %1641 = vmatpush1.bf16.msra.mxu0 0
        %1642 = vmatprep.subr.bf16.mxu0 0
        %1643 = vmatpush1.bf16.msra.mxu0 0
        %1644 = vmatprep.subr.bf16.mxu0 0
        %1645 = vmatpush1.bf16.msra.mxu0 0
        %1646 = vmatprep.subr.bf16.mxu0 0
        %1647 = vmatpush1.bf16.msra.mxu0 0
        %1648 = vmatprep.subr.bf16.mxu0 0
        %1649 = vmatpush1.bf16.msra.mxu0 0
        %1650 = vmatprep.subr.bf16.mxu0 0
        %1651 = vmatpush1.bf16.msra.mxu0 0
        %1652 = vmatprep.subr.bf16.mxu0 0
        %1653 = vmatpush1.bf16.msra.mxu0 0
        %1654 = vmatprep.subr.bf16.mxu0 0
        %1655 = vmatpush1.bf16.msra.mxu0 0
        %1656 = vmatprep.subr.bf16.mxu0 0
        %1657 = vmatpush1.bf16.msra.mxu0 0
        %1658 = vmatprep.subr.bf16.mxu0 0
        %1659 = vmatpush1.bf16.msra.mxu0 0
        %1660 = vmatprep.subr.bf16.mxu0 0
        %1661 = vmatpush1.bf16.msra.mxu0 0
        %1662 = vmatprep.subr.bf16.mxu0 0
        %1663 = vmatpush1.bf16.msra.mxu0 0
        %1664 = vmatprep.mubr.bf16.mxu0 0
        %1665 = vmatmul.mubr.bf16.gmra.mrb[0].mxu0 %v1626
        %v1666 = vpop.f32.mrb[0].mxu0
        %v1667 = vadd.f32 0.0, %v1666
        %v1668 = vpop.f32.mrb[0].mxu0
        %v1669 = vpop.f32.mrb[0].mxu0
        %v1670 = vpop.f32.mrb[0].mxu0
        %1671 = vdwg.mxu0
        %v1673 = vsel %vm1332, %v1620, 0
        %1675 = vmatprep.subr.bf16.mxu0 0
        %1676 = vmatpush1.bf16.msra.mxu0 %v1630
        %1677 = vmatprep.subr.bf16.mxu0 0
        %1678 = vmatpush1.bf16.msra.mxu0 0
        %1679 = vmatprep.subr.bf16.mxu0 0
        %1680 = vmatpush1.bf16.msra.mxu0 0
        %1681 = vmatprep.subr.bf16.mxu0 0
        %1682 = vmatpush1.bf16.msra.mxu0 0
        %1683 = vmatprep.subr.bf16.mxu0 0
        %1684 = vmatpush1.bf16.msra.mxu0 0
        %1685 = vmatprep.subr.bf16.mxu0 0
        %1686 = vmatpush1.bf16.msra.mxu0 0
        %1687 = vmatprep.subr.bf16.mxu0 0
        %1688 = vmatpush1.bf16.msra.mxu0 0
        %1689 = vmatprep.subr.bf16.mxu0 0
        %1690 = vmatpush1.bf16.msra.mxu0 0
        %1691 = vmatprep.subr.bf16.mxu0 0
        %1692 = vmatpush1.bf16.msra.mxu0 0
        %1693 = vmatprep.subr.bf16.mxu0 0
        %1694 = vmatpush1.bf16.msra.mxu0 0
        %1695 = vmatprep.subr.bf16.mxu0 0
        %1696 = vmatpush1.bf16.msra.mxu0 0
        %1697 = vmatprep.subr.bf16.mxu0 0
        %1698 = vmatpush1.bf16.msra.mxu0 0
        %1699 = vmatprep.subr.bf16.mxu0 0
        %1700 = vmatpush1.bf16.msra.mxu0 0
        %1701 = vmatprep.subr.bf16.mxu0 0
        %1702 = vmatpush1.bf16.msra.mxu0 0
        %1703 = vmatprep.subr.bf16.mxu0 0
        %1704 = vmatpush1.bf16.msra.mxu0 0
        %1705 = vmatprep.subr.bf16.mxu0 0
        %1706 = vmatpush1.bf16.msra.mxu0 0
        %1707 = vmatprep.mubr.bf16.mxu0 0
        %1708 = vmatmul.mubr.bf16.gmra.mrb[0].mxu0 %v1673
        %v1709 = vpop.f32.mrb[0].mxu0
        %v1710 = vadd.f32 0.0, %v1709
        %v1711 = vpop.f32.mrb[0].mxu0
        %v1712 = vpop.f32.mrb[0].mxu0
        %v1713 = vpop.f32.mrb[0].mxu0
        %1714 = vdwg.mxu0
        %v1716 = vsel %vm1332, %v1621, 0
        %v1719 = vsel %vm1628, %v1624, 0
        %1721 = vmatprep.subr.bf16.mxu0 0
        %1722 = vmatpush1.bf16.msra.mxu0 %v1719
        %1723 = vmatprep.subr.bf16.mxu0 0
        %1724 = vmatpush1.bf16.msra.mxu0 0
        %1725 = vmatprep.subr.bf16.mxu0 0
        %1726 = vmatpush1.bf16.msra.mxu0 0
        %1727 = vmatprep.subr.bf16.mxu0 0
        %1728 = vmatpush1.bf16.msra.mxu0 0
        %1729 = vmatprep.subr.bf16.mxu0 0
        %1730 = vmatpush1.bf16.msra.mxu0 0
        %1731 = vmatprep.subr.bf16.mxu0 0
        %1732 = vmatpush1.bf16.msra.mxu0 0
        %1733 = vmatprep.subr.bf16.mxu0 0
        %1734 = vmatpush1.bf16.msra.mxu0 0
        %1735 = vmatprep.subr.bf16.mxu0 0
        %1736 = vmatpush1.bf16.msra.mxu0 0
        %1737 = vmatprep.subr.bf16.mxu0 0
        %1738 = vmatpush1.bf16.msra.mxu0 0
        %1739 = vmatprep.subr.bf16.mxu0 0
        %1740 = vmatpush1.bf16.msra.mxu0 0
        %1741 = vmatprep.subr.bf16.mxu0 0
        %1742 = vmatpush1.bf16.msra.mxu0 0
        %1743 = vmatprep.subr.bf16.mxu0 0
        %1744 = vmatpush1.bf16.msra.mxu0 0
        %1745 = vmatprep.subr.bf16.mxu0 0
        %1746 = vmatpush1.bf16.msra.mxu0 0
        %1747 = vmatprep.subr.bf16.mxu0 0
        %1748 = vmatpush1.bf16.msra.mxu0 0
        %1749 = vmatprep.subr.bf16.mxu0 0
        %1750 = vmatpush1.bf16.msra.mxu0 0
        %1751 = vmatprep.subr.bf16.mxu0 0
        %1752 = vmatpush1.bf16.msra.mxu0 0
        %1753 = vmatprep.mubr.bf16.mxu0 0
        %1754 = vmatmul.mubr.bf16.gmra.mrb[0].mxu0 %v1716
        %v1755 = vpop.f32.mrb[0].mxu0
        %v1756 = vadd.f32 0.0, %v1755
        %v1757 = vpop.f32.mrb[0].mxu0
        %v1758 = vpop.f32.mrb[0].mxu0
        %v1759 = vpop.f32.mrb[0].mxu0
        %1760 = vdwg.mxu0
        %v1762 = vsel %vm1332, %v1622, 0
        %1764 = vmatprep.subr.bf16.mxu0 0
        %1765 = vmatpush1.bf16.msra.mxu0 %v1719
        %1766 = vmatprep.subr.bf16.mxu0 0
        %1767 = vmatpush1.bf16.msra.mxu0 0
        %1768 = vmatprep.subr.bf16.mxu0 0
        %1769 = vmatpush1.bf16.msra.mxu0 0
        %1770 = vmatprep.subr.bf16.mxu0 0
        %1771 = vmatpush1.bf16.msra.mxu0 0
        %1772 = vmatprep.subr.bf16.mxu0 0
        %1773 = vmatpush1.bf16.msra.mxu0 0
        %1774 = vmatprep.subr.bf16.mxu0 0
        %1775 = vmatpush1.bf16.msra.mxu0 0
        %1776 = vmatprep.subr.bf16.mxu0 0
        %1777 = vmatpush1.bf16.msra.mxu0 0
        %1778 = vmatprep.subr.bf16.mxu0 0
        %1779 = vmatpush1.bf16.msra.mxu0 0
        %1780 = vmatprep.subr.bf16.mxu0 0
        %1781 = vmatpush1.bf16.msra.mxu0 0
        %1782 = vmatprep.subr.bf16.mxu0 0
        %1783 = vmatpush1.bf16.msra.mxu0 0
        %1784 = vmatprep.subr.bf16.mxu0 0
        %1785 = vmatpush1.bf16.msra.mxu0 0
        %1786 = vmatprep.subr.bf16.mxu0 0
        %1787 = vmatpush1.bf16.msra.mxu0 0
        %1788 = vmatprep.subr.bf16.mxu0 0
        %1789 = vmatpush1.bf16.msra.mxu0 0
        %1790 = vmatprep.subr.bf16.mxu0 0
        %1791 = vmatpush1.bf16.msra.mxu0 0
        %1792 = vmatprep.subr.bf16.mxu0 0
        %1793 = vmatpush1.bf16.msra.mxu0 0
        %1794 = vmatprep.subr.bf16.mxu0 0
        %1795 = vmatpush1.bf16.msra.mxu0 0
        %1796 = vmatprep.mubr.bf16.mxu0 0
        %1797 = vmatmul.mubr.bf16.gmra.mrb[0].mxu0 %v1762
        %v1798 = vpop.f32.mrb[0].mxu0
        %v1799 = vadd.f32 0.0, %v1798
        %v1800 = vpop.f32.mrb[0].mxu0
        %v1801 = vpop.f32.mrb[0].mxu0
        %v1802 = vpop.f32.mrb[0].mxu0
        %1803 = vdwg.mxu0
        %1805 = vrot.lane.b32.xlu0 %v1710, 16
        %v1806 = vpop.permute.xlu0 %1805
        %1809 = vrot.lane.b32.xlu0 %v1756, 32
        %v1810 = vpop.permute.xlu0 %1809
        %1813 = vrot.lane.b32.xlu0 %v1799, 48
        %v1814 = vpop.permute.xlu0 %1813
        %v1816 = vsel %vm1385, %v1667, %v1806
        %vm1817 = vcmask 261120
        %v1818 = vsel %vm1817, %v1816, %v1810
        %vm1819 = vcmask 392192
        %v1820 = vsel %vm1819, %v1818, %v1814
        %v1821 = vpack.c.bf16 %v1820, %v1820
        %v1822 = vld [vmem:[%s624] sm:$0xf]
        %v1823 = vld [vmem:[%s624 + $0x4] sm:$0xf]
        %v1824 = vld [vmem:[%s624 + $0x8] sm:$0xf]
        %v1825 = vld [vmem:[%s624 + $0xc] sm:$0xf]
        %v1826 = vld [vmem:[%s624 + $0x10] sm:$0xf]
        %v1827 = vld [vmem:[%s624 + $0x14] sm:$0xf]
        %v1828 = vld [vmem:[%s624 + $0x18] sm:$0xf]
        %v1829 = vld [vmem:[%s624 + $0x1c] sm:$0xf]
        %v1838 = vunpack.c.l.b16 %v1822
        %v1839 = vunpack.c.l.b16 %v1823
        %v1840 = vunpack.c.l.b16 %v1824
        %v1841 = vunpack.c.l.b16 %v1825
        %v1842 = vunpack.c.l.b16 %v1826
        %v1843 = vunpack.c.l.b16 %v1827
        %v1844 = vunpack.c.l.b16 %v1828
        %v1845 = vunpack.c.l.b16 %v1829
        %v1846 = vpack.c.b16 %v1839, %v1838
        %v1847 = vpack.c.b16 %v1841, %v1840
        %v1848 = vpack.c.b16 %v1843, %v1842
        %v1849 = vpack.c.b16 %v1845, %v1844
        %v1855 = vsel %vm654, %v1821, 0
        %1857 = vmatprep.subr.bf16.mxu0 0
        %1858 = vmatpush1.bf16.msra.mxu0 %v1846
        %1859 = vmatprep.subr.bf16.mxu0 0
        %1860 = vmatpush1.bf16.msra.mxu0 %v1847
        %1861 = vmatprep.subr.bf16.mxu0 0
        %1862 = vmatpush1.bf16.msra.mxu0 %v1848
        %1863 = vmatprep.subr.bf16.mxu0 0
        %1864 = vmatpush1.bf16.msra.mxu0 %v1849
        %1865 = vmatprep.subr.bf16.mxu0 0
        %1866 = vmatpush1.bf16.msra.mxu0 0
        %1867 = vmatprep.subr.bf16.mxu0 0
        %1868 = vmatpush1.bf16.msra.mxu0 0
        %1869 = vmatprep.subr.bf16.mxu0 0
        %1870 = vmatpush1.bf16.msra.mxu0 0
        %1871 = vmatprep.subr.bf16.mxu0 0
        %1872 = vmatpush1.bf16.msra.mxu0 0
        %1873 = vmatprep.subr.bf16.mxu0 0
        %1874 = vmatpush1.bf16.msra.mxu0 0
        %1875 = vmatprep.subr.bf16.mxu0 0
        %1876 = vmatpush1.bf16.msra.mxu0 0
        %1877 = vmatprep.subr.bf16.mxu0 0
        %1878 = vmatpush1.bf16.msra.mxu0 0
        %1879 = vmatprep.subr.bf16.mxu0 0
        %1880 = vmatpush1.bf16.msra.mxu0 0
        %1881 = vmatprep.subr.bf16.mxu0 0
        %1882 = vmatpush1.bf16.msra.mxu0 0
        %1883 = vmatprep.subr.bf16.mxu0 0
        %1884 = vmatpush1.bf16.msra.mxu0 0
        %1885 = vmatprep.subr.bf16.mxu0 0
        %1886 = vmatpush1.bf16.msra.mxu0 0
        %1887 = vmatprep.subr.bf16.mxu0 0
        %1888 = vmatpush1.bf16.msra.mxu0 0
        %1889 = vmatprep.mubr.bf16.mxu0 0
        %1890 = vmatmul.mubr.bf16.gmra.mrb[0].mxu0 %v1855
        %v1891 = vpop.f32.mrb[0].mxu0
        %v1892 = vadd.f32 0.0, %v1891
        %v1893 = vpop.f32.mrb[0].mxu0
        %v1894 = vpop.f32.mrb[0].mxu0
        %v1895 = vpop.f32.mrb[0].mxu0
        %1896 = vdwg.mxu0
        %v1897 = vadd.f32 %v651, %v1892
        %v1898 = vld [vmem:[%s627] sm:$0x1]
        %v1899 = vmul.f32 %v1897, %v1897
        %v1900 = vsel %vm654, %v1899, 0.0
        %1901 = vadd.xlane.f32.xlu0 %v1900
        %v1902 = vpop.xlane.xlu0 %1901
        %v1903 = vmul.f32 %v1902, %v658
        %v1904 = vadd.f32 %v1903, 1e-05
        %v1905 = vrsqrt.pop %v1904
        %v1906 = vmul.f32 %v1897, %v1905
        %v1908 = vlaneseq
        %v1909 = vshrl.u32 %v1908, 7
        %v1910 = vsub.s32 0, %v1909
        %v1911 = vrot.slane %v1898, %v1910
        %v1913 = vmul.f32 %v1906, %v1911
        %v1914 = vpack.c.bf16 %v1913, %v1913
        %v1915 = vld [vmem:[%s632] sm:$0xf]
        %v1916 = vld [vmem:[%s632 + $0x4] sm:$0xf]
        %v1917 = vld [vmem:[%s632 + $0x8] sm:$0xf]
        %v1918 = vld [vmem:[%s632 + $0xc] sm:$0xf]
        %v1919 = vld [vmem:[%s632 + $0x10] sm:$0xf]
        %v1920 = vld [vmem:[%s632 + $0x14] sm:$0xf]
        %v1921 = vld [vmem:[%s632 + $0x18] sm:$0xf]
        %v1922 = vld [vmem:[%s632 + $0x1c] sm:$0xf]
        %v1931 = vunpack.c.l.b16 %v1915
        %v1932 = vunpack.c.l.b16 %v1916
        %v1933 = vunpack.c.l.b16 %v1917
        %v1934 = vunpack.c.l.b16 %v1918
        %v1935 = vunpack.c.l.b16 %v1919
        %v1936 = vunpack.c.l.b16 %v1920
        %v1937 = vunpack.c.l.b16 %v1921
        %v1938 = vunpack.c.l.b16 %v1922
        %v1939 = vpack.c.b16 %v1932, %v1931
        %v1940 = vpack.c.b16 %v1934, %v1933
        %v1941 = vpack.c.b16 %v1936, %v1935
        %v1942 = vpack.c.b16 %v1938, %v1937
        %v1948 = vsel %vm654, %v1914, 0
        %1950 = vmatprep.subr.bf16.mxu0 0
        %1951 = vmatpush1.bf16.msra.mxu0 %v1939
        %1952 = vmatprep.subr.bf16.mxu0 0
        %1953 = vmatpush1.bf16.msra.mxu0 %v1940
        %1954 = vmatprep.subr.bf16.mxu0 0
        %1955 = vmatpush1.bf16.msra.mxu0 %v1941
        %1956 = vmatprep.subr.bf16.mxu0 0
        %1957 = vmatpush1.bf16.msra.mxu0 %v1942
        %1958 = vmatprep.subr.bf16.mxu0 0
        %1959 = vmatpush1.bf16.msra.mxu0 0
        %1960 = vmatprep.subr.bf16.mxu0 0
        %1961 = vmatpush1.bf16.msra.mxu0 0
        %1962 = vmatprep.subr.bf16.mxu0 0
        %1963 = vmatpush1.bf16.msra.mxu0 0
        %1964 = vmatprep.subr.bf16.mxu0 0
        %1965 = vmatpush1.bf16.msra.mxu0 0
        %1966 = vmatprep.subr.bf16.mxu0 0
        %1967 = vmatpush1.bf16.msra.mxu0 0
        %1968 = vmatprep.subr.bf16.mxu0 0
        %1969 = vmatpush1.bf16.msra.mxu0 0
        %1970 = vmatprep.subr.bf16.mxu0 0
        %1971 = vmatpush1.bf16.msra.mxu0 0
        %1972 = vmatprep.subr.bf16.mxu0 0
        %1973 = vmatpush1.bf16.msra.mxu0 0
        %1974 = vmatprep.subr.bf16.mxu0 0
        %1975 = vmatpush1.bf16.msra.mxu0 0
        %1976 = vmatprep.subr.bf16.mxu0 0
        %1977 = vmatpush1.bf16.msra.mxu0 0
        %1978 = vmatprep.subr.bf16.mxu0 0
        %1979 = vmatpush1.bf16.msra.mxu0 0
        %1980 = vmatprep.subr.bf16.mxu0 0
        %1981 = vmatpush1.bf16.msra.mxu0 0
        %1982 = vmatprep.mubr.bf16.mxu0 0
        %1983 = vmatmul.mubr.bf16.gmra.mrb[0].mxu0 %v1948
        %v1984 = vpop.f32.mrb[0].mxu0
        %v1985 = vadd.f32 0.0, %v1984
        %v1986 = vpop.f32.mrb[0].mxu0
        %v1987 = vpop.f32.mrb[0].mxu0
        %v1988 = vpop.f32.mrb[0].mxu0
        %1989 = vdwg.mxu0
        %v1990 = vld [vmem:[%s642] sm:$0xf]
        %v1991 = vld [vmem:[%s642 + $0x4] sm:$0xf]
        %v1992 = vld [vmem:[%s642 + $0x8] sm:$0xf]
        %v1993 = vld [vmem:[%s642 + $0xc] sm:$0xf]
        %v1994 = vld [vmem:[%s642 + $0x10] sm:$0xf]
        %v1995 = vld [vmem:[%s642 + $0x14] sm:$0xf]
        %v1996 = vld [vmem:[%s642 + $0x18] sm:$0xf]
        %v1997 = vld [vmem:[%s642 + $0x1c] sm:$0xf]
        %v2006 = vunpack.c.l.b16 %v1990
        %v2007 = vunpack.c.l.b16 %v1991
        %v2008 = vunpack.c.l.b16 %v1992
        %v2009 = vunpack.c.l.b16 %v1993
        %v2010 = vunpack.c.l.b16 %v1994
        %v2011 = vunpack.c.l.b16 %v1995
        %v2012 = vunpack.c.l.b16 %v1996
        %v2013 = vunpack.c.l.b16 %v1997
        %v2014 = vpack.c.b16 %v2007, %v2006
        %v2015 = vpack.c.b16 %v2009, %v2008
        %v2016 = vpack.c.b16 %v2011, %v2010
        %v2017 = vpack.c.b16 %v2013, %v2012
        %2022 = vmatprep.subr.bf16.mxu0 0
        %2023 = vmatpush1.bf16.msra.mxu0 %v2014
        %2024 = vmatprep.subr.bf16.mxu0 0
        %2025 = vmatpush1.bf16.msra.mxu0 %v2015
        %2026 = vmatprep.subr.bf16.mxu0 0
        %2027 = vmatpush1.bf16.msra.mxu0 %v2016
        %2028 = vmatprep.subr.bf16.mxu0 0
        %2029 = vmatpush1.bf16.msra.mxu0 %v2017
        %2030 = vmatprep.subr.bf16.mxu0 0
        %2031 = vmatpush1.bf16.msra.mxu0 0
        %2032 = vmatprep.subr.bf16.mxu0 0
        %2033 = vmatpush1.bf16.msra.mxu0 0
        %2034 = vmatprep.subr.bf16.mxu0 0
        %2035 = vmatpush1.bf16.msra.mxu0 0
        %2036 = vmatprep.subr.bf16.mxu0 0
        %2037 = vmatpush1.bf16.msra.mxu0 0
        %2038 = vmatprep.subr.bf16.mxu0 0
        %2039 = vmatpush1.bf16.msra.mxu0 0
        %2040 = vmatprep.subr.bf16.mxu0 0
        %2041 = vmatpush1.bf16.msra.mxu0 0
        %2042 = vmatprep.subr.bf16.mxu0 0
        %2043 = vmatpush1.bf16.msra.mxu0 0
        %2044 = vmatprep.subr.bf16.mxu0 0
        %2045 = vmatpush1.bf16.msra.mxu0 0
        %2046 = vmatprep.subr.bf16.mxu0 0
        %2047 = vmatpush1.bf16.msra.mxu0 0
        %2048 = vmatprep.subr.bf16.mxu0 0
        %2049 = vmatpush1.bf16.msra.mxu0 0
        %2050 = vmatprep.subr.bf16.mxu0 0
        %2051 = vmatpush1.bf16.msra.mxu0 0
        %2052 = vmatprep.subr.bf16.mxu0 0
        %2053 = vmatpush1.bf16.msra.mxu0 0
        %2054 = vmatprep.mubr.bf16.mxu0 0
        %2055 = vmatmul.mubr.bf16.gmra.mrb[0].mxu0 %v1948
        %v2056 = vpop.f32.mrb[0].mxu0
        %v2057 = vadd.f32 0.0, %v2056
        %v2058 = vpop.f32.mrb[0].mxu0
        %v2059 = vpop.f32.mrb[0].mxu0
        %v2060 = vpop.f32.mrb[0].mxu0
        %2061 = vdwg.mxu0
        %v2062 = vxor.u32 %v1985, 2147483648
        %v2063 = vmul.f32 %v2062, 1.442695
        %v2064 = vpow.pop %v2063
        %v2065 = vadd.f32 %v2064, 1.0
        %v2066 = vrcp.pop %v2065
        %v2067 = vmul.f32 1.0, %v2066
        %v2068 = vmul.f32 %v1985, %v2067
        %v2069 = vmul.f32 %v2068, %v2057
        %v2070 = vpack.c.bf16 %v2069, %v2069
        %v2071 = vld [vmem:[%s637] sm:$0xf]
        %v2072 = vld [vmem:[%s637 + $0x4] sm:$0xf]
        %v2073 = vld [vmem:[%s637 + $0x8] sm:$0xf]
        %v2074 = vld [vmem:[%s637 + $0xc] sm:$0xf]
        %v2075 = vld [vmem:[%s637 + $0x10] sm:$0xf]
        %v2076 = vld [vmem:[%s637 + $0x14] sm:$0xf]
        %v2077 = vld [vmem:[%s637 + $0x18] sm:$0xf]
        %v2078 = vld [vmem:[%s637 + $0x1c] sm:$0xf]
        %v2079 = vld [vmem:[%s637 + $0x20] sm:$0xf]
        %v2080 = vld [vmem:[%s637 + $0x24] sm:$0xf]
        %v2081 = vld [vmem:[%s637 + $0x28] sm:$0xf]
        %v2082 = vld [vmem:[%s637 + $0x2c] sm:$0xf]
        %v2083 = vld [vmem:[%s637 + $0x30] sm:$0xf]
        %v2084 = vld [vmem:[%s637 + $0x34] sm:$0xf]
        %v2085 = vld [vmem:[%s637 + $0x38] sm:$0xf]
        %v2086 = vld [vmem:[%s637 + $0x3c] sm:$0xf]
        %v2103 = vunpack.c.l.b16 %v2071
        %v2104 = vunpack.c.l.b16 %v2072
        %v2105 = vunpack.c.l.b16 %v2073
        %v2106 = vunpack.c.l.b16 %v2074
        %v2107 = vunpack.c.l.b16 %v2075
        %v2108 = vunpack.c.l.b16 %v2076
        %v2109 = vunpack.c.l.b16 %v2077
        %v2110 = vunpack.c.l.b16 %v2078
        %v2111 = vunpack.c.l.b16 %v2079
        %v2112 = vunpack.c.l.b16 %v2080
        %v2113 = vunpack.c.l.b16 %v2081
        %v2114 = vunpack.c.l.b16 %v2082
        %v2115 = vunpack.c.l.b16 %v2083
        %v2116 = vunpack.c.l.b16 %v2084
        %v2117 = vunpack.c.l.b16 %v2085
        %v2118 = vunpack.c.l.b16 %v2086
        %v2119 = vpack.c.b16 %v2104, %v2103
        %v2120 = vpack.c.b16 %v2106, %v2105
        %v2121 = vpack.c.b16 %v2108, %v2107
        %v2122 = vpack.c.b16 %v2110, %v2109
        %v2123 = vpack.c.b16 %v2112, %v2111
        %v2124 = vpack.c.b16 %v2114, %v2113
        %v2125 = vpack.c.b16 %v2116, %v2115
        %v2126 = vpack.c.b16 %v2118, %v2117
        %2135 = vmatprep.subr.bf16.mxu0 0
        %2136 = vmatpush1.bf16.msra.mxu0 %v2119
        %2137 = vmatprep.subr.bf16.mxu0 0
        %2138 = vmatpush1.bf16.msra.mxu0 %v2120
        %2139 = vmatprep.subr.bf16.mxu0 0
        %2140 = vmatpush1.bf16.msra.mxu0 %v2121
        %2141 = vmatprep.subr.bf16.mxu0 0
        %2142 = vmatpush1.bf16.msra.mxu0 %v2122
        %2143 = vmatprep.subr.bf16.mxu0 0
        %2144 = vmatpush1.bf16.msra.mxu0 %v2123
        %2145 = vmatprep.subr.bf16.mxu0 0
        %2146 = vmatpush1.bf16.msra.mxu0 %v2124
        %2147 = vmatprep.subr.bf16.mxu0 0
        %2148 = vmatpush1.bf16.msra.mxu0 %v2125
        %2149 = vmatprep.subr.bf16.mxu0 0
        %2150 = vmatpush1.bf16.msra.mxu0 %v2126
        %2151 = vmatprep.subr.bf16.mxu0 0
        %2152 = vmatpush1.bf16.msra.mxu0 0
        %2153 = vmatprep.subr.bf16.mxu0 0
        %2154 = vmatpush1.bf16.msra.mxu0 0
        %2155 = vmatprep.subr.bf16.mxu0 0
        %2156 = vmatpush1.bf16.msra.mxu0 0
        %2157 = vmatprep.subr.bf16.mxu0 0
        %2158 = vmatpush1.bf16.msra.mxu0 0
        %2159 = vmatprep.subr.bf16.mxu0 0
        %2160 = vmatpush1.bf16.msra.mxu0 0
        %2161 = vmatprep.subr.bf16.mxu0 0
        %2162 = vmatpush1.bf16.msra.mxu0 0
        %2163 = vmatprep.subr.bf16.mxu0 0
        %2164 = vmatpush1.bf16.msra.mxu0 0
        %2165 = vmatprep.subr.bf16.mxu0 0
        %2166 = vmatpush1.bf16.msra.mxu0 0
        %2167 = vmatprep.mubr.bf16.mxu0 0
        %2168 = vmatmul.mubr.bf16.gmra.mrb[0].mxu0 %v2070
        %v2169 = vpop.f32.mrb[0].mxu0
        %v2170 = vadd.f32 0.0, %v2169
        %v2171 = vpop.f32.mrb[0].mxu0
        %v2172 = vpop.f32.mrb[0].mxu0
        %v2173 = vpop.f32.mrb[0].mxu0
        %2174 = vdwg.mxu0
        %v2175 = vadd.f32 %v1897, %v2170
        %2176 = vst.msk [vmem:[#allocation2] sm:$0xff] %vm654, %v2175
        %p2177 = scmp.eq.s32.totalorder %s33, 1
        // Predicated region
        $region81: #{tpu_custom_call.1} parent=75 // pred_check
          %p2178 = pneg %p2177
        $region82: #{tpu_custom_call.1} parent=75 // pred_check_branch
          %2180 = sbr.rel (%p2178) target = $region84
        $region83: #{tpu_custom_call.1} parent=75 // pred_region
          %v2181 = vld [vmem:[%s12] sm:$0x1]
          %v2182 = vmul.f32 %v2175, %v2175
          %vm2183 = vcmask 523271
          %v2184 = vsel %vm2183, %v2182, 0.0
          %2185 = vadd.xlane.f32.xlu0 %v2184
          %v2186 = vpop.xlane.xlu0 %2185
          %v2187 = vmul.f32 %v2186, %v658
          %v2188 = vadd.f32 %v2187, 1e-05
          %v2189 = vrsqrt.pop %v2188
          %v2190 = vmul.f32 %v2175, %v2189
          %v2192 = vlaneseq
          %v2193 = vshrl.u32 %v2192, 7
          %v2194 = vsub.s32 0, %v2193
          %v2195 = vrot.slane %v2181, %v2194
          %v2197 = vmul.f32 %v2190, %v2195
          %v2198 = vpack.c.bf16 %v2197, %v2197
          %v2199 = vld [vmem:[%s13] sm:$0xff]
          %v2200 = vld [vmem:[%s13 + $0x8] sm:$0xff]
          %v2201 = vld [vmem:[%s13 + $0x10] sm:$0xff]
          %v2202 = vld [vmem:[%s13 + $0x18] sm:$0xff]
          %v2203 = vld [vmem:[%s13 + $0x20] sm:$0xff]
          %v2204 = vld [vmem:[%s13 + $0x28] sm:$0xff]
          %v2205 = vld [vmem:[%s13 + $0x30] sm:$0xff]
          %v2206 = vld [vmem:[%s13 + $0x38] sm:$0xff]
          %v2208 = vshrl.u32 %v2198, 16
          %v2210 = vrot.slane %v2208, 3
          %v2219 = vunpack.c.l.b16 %v2199
          %v2220 = vunpack.c.h.b16 %v2199
          %v2221 = vunpack.c.l.b16 %v2200
          %v2222 = vunpack.c.h.b16 %v2200
          %v2223 = vunpack.c.l.b16 %v2201
          %v2224 = vunpack.c.h.b16 %v2201
          %v2225 = vunpack.c.l.b16 %v2202
          %v2226 = vunpack.c.h.b16 %v2202
          %v2227 = vunpack.c.l.b16 %v2203
          %v2228 = vunpack.c.h.b16 %v2203
          %v2229 = vunpack.c.l.b16 %v2204
          %v2230 = vunpack.c.h.b16 %v2204
          %v2231 = vunpack.c.l.b16 %v2205
          %v2232 = vunpack.c.h.b16 %v2205
          %v2233 = vunpack.c.l.b16 %v2206
          %v2234 = vunpack.c.h.b16 %v2206
          %v2235 = vpack.c.b16 %v2221, %v2219
          %v2236 = vpack.c.b16 %v2222, %v2220
          %v2237 = vpack.c.b16 %v2225, %v2223
          %v2238 = vpack.c.b16 %v2226, %v2224
          %v2239 = vpack.c.b16 %v2229, %v2227
          %v2240 = vpack.c.b16 %v2230, %v2228
          %v2241 = vpack.c.b16 %v2233, %v2231
          %v2242 = vpack.c.b16 %v2234, %v2232
          %v2252 = vsel %vm654, %v2210, 0
          %2254 = vmatprep.subr.bf16.mxu0 %v2236
          %2255 = vmatpush1.bf16.msra.mxu0 %v2235
          %2256 = vmatprep.subr.bf16.mxu0 %v2238
          %2257 = vmatpush1.bf16.msra.mxu0 %v2237
          %2258 = vmatprep.subr.bf16.mxu0 %v2240
          %2259 = vmatpush1.bf16.msra.mxu0 %v2239
          %2260 = vmatprep.subr.bf16.mxu0 %v2242
          %2261 = vmatpush1.bf16.msra.mxu0 %v2241
          %2262 = vmatprep.subr.bf16.mxu0 0
          %2263 = vmatpush1.bf16.msra.mxu0 0
          %2264 = vmatprep.subr.bf16.mxu0 0
          %2265 = vmatpush1.bf16.msra.mxu0 0
          %2266 = vmatprep.subr.bf16.mxu0 0
          %2267 = vmatpush1.bf16.msra.mxu0 0
          %2268 = vmatprep.subr.bf16.mxu0 0
          %2269 = vmatpush1.bf16.msra.mxu0 0
          %2270 = vmatprep.subr.bf16.mxu0 0
          %2271 = vmatpush1.bf16.msra.mxu0 0
          %2272 = vmatprep.subr.bf16.mxu0 0
          %2273 = vmatpush1.bf16.msra.mxu0 0
          %2274 = vmatprep.subr.bf16.mxu0 0
          %2275 = vmatpush1.bf16.msra.mxu0 0
          %2276 = vmatprep.subr.bf16.mxu0 0
          %2277 = vmatpush1.bf16.msra.mxu0 0
          %2278 = vmatprep.subr.bf16.mxu0 0
          %2279 = vmatpush1.bf16.msra.mxu0 0
          %2280 = vmatprep.subr.bf16.mxu0 0
          %2281 = vmatpush1.bf16.msra.mxu0 0
          %2282 = vmatprep.subr.bf16.mxu0 0
          %2283 = vmatpush1.bf16.msra.mxu0 0
          %2284 = vmatprep.subr.bf16.mxu0 0
          %2285 = vmatpush1.bf16.msra.mxu0 0
          %2286 = vmatprep.mubr.bf16.mxu0 0
          %2287 = vmatmul.mubr.bf16.gmra.mrb[0].mxu0 %v2252
          %v2288 = vpop.f32.mrb[0].mxu0
          %v2289 = vadd.f32 0.0, %v2288
          %v2290 = vpop.f32.mrb[0].mxu0
          %v2291 = vadd.f32 0.0, %v2290
          %v2292 = vpop.f32.mrb[0].mxu0
          %v2293 = vpop.f32.mrb[0].mxu0
          %2294 = vdwg.mxu0
          %v2297 = vcombine.low %v2289, %v2291
          %v2299 = vunpack.c.l.s4 1966171168
          %v2300 = vunpack.c.0.s8 %v2299
          %v2301 = vlaneseq
          %v2302 = vshrl.u32 %v2301, 7
          %v2303 = vsub.s32 %v2300, %v2302
          %v2304 = vrot.slane %v2297, %v2303
          %v2306 = vunpack.c.l.s4 1966171168
          %v2307 = vunpack.c.0.s8 %v2306
          %v2308 = vlaneseq
          %v2309 = vshrl.u32 %v2308, 7
          %v2310 = vsub.s32 %v2307, %v2309
          %v2311 = vrot.slane %v2304, %v2310
          %v2313 = vlaneseq
          %vm2314 = vcmp.ge.s32.totalorder %v2313, 0
          %vm2315 = vcmp.lt.s32.totalorder %v2313, 256
          %vm2316 = vmand %vm2314, %vm2315
          %2317 = vst.msk [vmem:[%s597] sm:$0x3] %vm2316, %v2311
        $region84: #{tpu_custom_call.1} parent=75 // pred_fallthru
          _
        %s2318 = sand.u32 %s392, 1
        %s2319 = scalar_lea.sflag [#allocation4], %s2318
        %s2320 = sand.u32 %s392, 1
        %s2321 = smul.addr %s2320, 2
        %s2322 = scalar_lea.vmem [#allocation3], %s2321
        // Predicated region
        $region85: #{tpu_custom_call.1} parent=75 // pred_check
          %p2323 = pneg %p402
        $region86: #{tpu_custom_call.1} parent=75 // pred_check_branch
          %2325 = sbr.rel (%p2323) target = $region88
        $region87: #{tpu_custom_call.1} parent=75 // pred_region
          %s2327 = ssub.s32 32, 32
          %2328 = vsyncadd %s2319, %s2327
          %s2329 = smul.addr %s32, 2
          %s2330 = smul.addr %s2329, 16
          %s2331 = scalar_lea.hbm %s14, %s2330
          %s2333 = sshll.u32 %s2322, 4
          %s2334 = int_to_ptr.vmem [resolvable:$true] %s2333
          %2336 = dma.vmem_to_hbm [thread:$0]  %s2334, 32, %s2331, %s2319
        $region88: #{tpu_custom_call.1} parent=75 // pred_fallthru
          _
      $region76: #{tpu_custom_call.1} parent=5 // pred_fallthru
        _
      %p2337 = scmp.le.s32.totalorder 2, %s23
      // Predicated region
      $region89: #{tpu_custom_call.1} parent=5 // pred_check
        %p2338 = pneg %p2337
      $region90: #{tpu_custom_call.1} parent=5 // pred_check_branch
        %2340 = sbr.rel (%p2338) target = $region92
      $region91: #{tpu_custom_call.1} parent=5 // pred_region
        %s2341 = ssub.s32 %s23, 2
        // Predicated region
        $region93: #{tpu_custom_call.1} parent=91 // pred_check
          %p2342 = pneg %p408
        $region94: #{tpu_custom_call.1} parent=91 // pred_check_branch
          %2344 = sbr.rel (%p2342) target = $region96
        $region95: #{tpu_custom_call.1} parent=91 // pred_region
          %s2345 = sand.u32 %s393, 1
          %s2346 = scalar_lea.sflag [#allocation4], %s2345
          %s2347 = sand.u32 %s393, 1
          %s2348 = smul.addr %s2347, 2
          %s2349 = scalar_lea.vmem [#allocation3], %s2348
          %2350 = dma.done %s2346, 32
        $region96: #{tpu_custom_call.1} parent=91 // pred_fallthru
          _
      $region92: #{tpu_custom_call.1} parent=5 // pred_fallthru
        _
    $region6: #{tpu_custom_call.1} parent=1 // loop_footer
      %s27 = sadd.s32 1, %s23
    $region7: #{tpu_custom_call.1} parent=1 // loop_footer_branch
      %22 = sbr.rel target = $region3
    $region8: #{tpu_custom_call.1} parent=1 // loop_exit
      _
    %2351 = vsyncpa [#allocation4], 1
    %s2352 = scalar_lea.sflag [#allocation4], 1
    %2353 = vsyncpa %s2352, 1

</llo_original>
